<compile_context>
chip_gen: v7x
topology: tpu7x:2x2x1
jax: 0.10.0
libtpu: 0.0.40
codegen_flags: <defaults>
</compile_context>

<pallas_src>
import functools
import math

import jax
import jax.numpy as jnp
from jax import lax
from jax.experimental import pallas as pl
from jax.experimental.pallas import tpu as pltpu


def _mha_kernel(q_ref, k_ref, v_ref, mask_ref,
                wq_ref, bq_ref, wk_ref, bk_ref, wv_ref, bv_ref,
                o_ref, ka_scr, va_scr, *, head_num, dim_per_head):
    f32 = jnp.float32
    bf16 = jnp.bfloat16
    qi = pl.program_id(1)

    # --- K/V projections: computed once per batch element (qi == 0), cached in
    #     VMEM scratch as bf16 and reused for every query tile of this batch. ---
    @pl.when(qi == 0)
    def _():
        xk = k_ref[0]                                            # (S, F) bf16
        xv = v_ref[0]                                            # (S, F) bf16
        ka = jnp.dot(xk, wk_ref[...], preferred_element_type=f32) + bk_ref[...]
        va = jnp.dot(xv, wv_ref[...], preferred_element_type=f32) + bv_ref[...]
        ka_scr[...] = ka.astype(bf16)                            # (S, H*D) bf16
        va_scr[...] = va.astype(bf16)

    # --- Q projection for this query tile. The 1/sqrt(D) attention scale is
    #     already folded into wq/bq in the wrapper. Cast to bf16 once. ---
    xq = q_ref[0]                                                # (TQ, F) bf16
    qa = (jnp.dot(xq, wq_ref[...], preferred_element_type=f32)
          + bq_ref[...]).astype(bf16)                            # (TQ, H*D) bf16

    mask = mask_ref[0]                                           # (TQ, 1) f32

    # Contract the last dim of both operands: Q @ K^T without a K transpose.
    dn = (((1,), (1,)), ((), ()))

    head_outs = []
    for h in range(head_num):        # static unroll; H is small
        lo = h * dim_per_head
        hi = lo + dim_per_head
        qh = qa[:, lo:hi]                                        # (TQ, D) bf16
        kh = ka_scr[:, lo:hi]                                    # (S,  D) bf16
        vh = va_scr[:, lo:hi]                                    # (S,  D) bf16

        s = lax.dot_general(qh, kh, dimension_numbers=dn,
                            preferred_element_type=f32)          # (TQ, S) f32
        m = jnp.max(s, axis=-1, keepdims=True)
        p = jnp.exp(s - m)                                       # f32 softmax math
        inv_l = pl.reciprocal(jnp.sum(p, axis=-1, keepdims=True), approx=True)
        # Deferred normalization: P@V first, then scale the small (TQ, D)
        # result; the per-row output mask is folded into the same factor.
        oh = jnp.dot(p.astype(bf16), vh, preferred_element_type=f32)
        head_outs.append(oh * (inv_l * mask))

    # Head-major concat == torch.cat([head_0, ..., head_{H-1}], dim=2).
    out = jnp.concatenate(head_outs, axis=-1)                    # (TQ, H*D)
    o_ref[0] = out.astype(o_ref.dtype)


def multi_head_attention(q, k, v, mask, wq, bq, wk, bk, wv, bv,
                         *, q_tile=512, out_dtype=jnp.float32):
    """q, k, v: (B, S, F); mask: (B, S, 1).
    wq/wk/wv: (H, F, D) per-head W^T of nn.Linear; bq/bk/bv: (H, D)."""
    B, S, F = q.shape
    H, _, D = wq.shape
    HD = H * D
    bf16 = jnp.bfloat16
    f32 = jnp.float32
    scale = 1.0 / math.sqrt(float(D))

    # Stack per-head weights head-major along the output dim -> (F, H*D).
    def stack_w(w):
        return jnp.transpose(w, (1, 0, 2)).reshape(F, HD)

    def stack_b(b):
        return b.reshape(1, HD)

    # Fold the 1/sqrt(D) attention scale into the Q projection (W and b), then
    # cast weights to bf16 (halves weight DMA + enables single-pass MXU).
    wq_all = (stack_w(wq) * scale).astype(bf16)
    bq_all = (stack_b(bq) * scale).astype(f32)
    wk_all = stack_w(wk).astype(bf16)
    bk_all = stack_b(bk).astype(f32)
    wv_all = stack_w(wv).astype(bf16)
    bv_all = stack_b(bv).astype(f32)

    q_bf = q.astype(bf16)
    k_bf = k.astype(bf16)
    v_bf = v.astype(bf16)
    mask = mask.astype(f32)

    TQ = S if S <= q_tile else q_tile
    assert S % TQ == 0, "seq_len must be divisible by the query tile"
    n_q = S // TQ

    q_spec = pl.BlockSpec((1, TQ, F), lambda b, qi: (b, qi, 0))
    kv_spec = pl.BlockSpec((1, S, F), lambda b, qi: (b, 0, 0))   # fetched once per b
    mask_spec = pl.BlockSpec((1, TQ, 1), lambda b, qi: (b, qi, 0))
    w_spec = pl.BlockSpec((F, HD), lambda b, qi: (0, 0))         # constant index map
    b_spec = pl.BlockSpec((1, HD), lambda b, qi: (0, 0))
    out_spec = pl.BlockSpec((1, TQ, HD), lambda b, qi: (b, qi, 0))

    return pl.pallas_call(
        functools.partial(_mha_kernel, head_num=H, dim_per_head=D),
        out_shape=jax.ShapeDtypeStruct((B, S, HD), out_dtype),
        grid_spec=pltpu.PrefetchScalarGridSpec(
            num_scalar_prefetch=0,
            grid=(B, n_q),
            in_specs=[q_spec, kv_spec, kv_spec, mask_spec,
                      w_spec, b_spec, w_spec, b_spec, w_spec, b_spec],
            out_specs=out_spec,
            scratch_shapes=[pltpu.VMEM((S, HD), bf16),   # cached K projection
                            pltpu.VMEM((S, HD), bf16)],  # cached V projection
        ),
        compiler_params=pltpu.CompilerParams(
            # b shards across TensorCores; qi must be "arbitrary" because the
            # K/V scratch cache is reused across consecutive query tiles.
            dimension_semantics=("parallel", "arbitrary"),
            vmem_limit_bytes=56 * 1024 * 1024),
    )(q_bf, k_bf, v_bf, mask, wq_all, bq_all, wk_all, bk_all, wv_all, bv_all)


def _reference(q, k, v, mask, wq, bq, wk, bk, wv, bv):
    H, F, D = wq.shape
    outs = []
    for h in range(H):
        Q = q @ wq[h] + bq[h]
        K = k @ wk[h] + bk[h]
        V = v @ wv[h] + bv[h]
        scores = jnp.einsum("bqd,bkd->bqk", Q, K) / math.sqrt(float(D))
        att = jax.nn.softmax(scores, axis=-1)
        outs.append(jnp.einsum("bqk,bkd->bqd", att, V) * mask)
    return jnp.concatenate(outs, axis=2)


if __name__ == "__main__":
    B, S, F, H = 2, 8, 32, 4
    D = F // H

    key = jax.random.PRNGKey(0)
    kq, kk, kv, km, kwq, kbq, kwk, kbk, kwv, kbv = jax.random.split(key, 10)

    q = jax.random.normal(kq, (B, S, F), dtype=jnp.float32)
    k = jax.random.normal(kk, (B, S, F), dtype=jnp.float32)
    v = jax.random.normal(kv, (B, S, F), dtype=jnp.float32)
    mask = (jax.random.uniform(km, (B, S, 1)) > 0.3).astype(jnp.float32)

    # Deterministic nn.Linear-style init: U(-1/sqrt(F), 1/sqrt(F)); weights stored as W^T.
    bound = 1.0 / math.sqrt(F)
    wq = jax.random.uniform(kwq, (H, F, D), minval=-bound, maxval=bound, dtype=jnp.float32)
    bq = jax.random.uniform(kbq, (H, D), minval=-bound, maxval=bound, dtype=jnp.float32)
    wk = jax.random.uniform(kwk, (H, F, D), minval=-bound, maxval=bound, dtype=jnp.float32)
    bk = jax.random.uniform(kbk, (H, D), minval=-bound, maxval=bound, dtype=jnp.float32)
    wv = jax.random.uniform(kwv, (H, F, D), minval=-bound, maxval=bound, dtype=jnp.float32)
    bv = jax.random.uniform(kbv, (H, D), minval=-bound, maxval=bound, dtype=jnp.float32)

    out = multi_head_attention(q, k, v, mask, wq, bq, wk, bk, wv, bv)
    out = jax.block_until_ready(out)

    ref = _reference(q, k, v, mask, wq, bq, wk, bk, wv, bv)
    assert out.shape == (B, S, F), out.shape
    # bf16 inputs/weights on the MXU + approx reciprocal => bf16-grade tolerance.
    assert jnp.allclose(out, ref, atol=3e-2, rtol=3e-2), float(jnp.max(jnp.abs(out - ref)))

    print("KERNEL_OK")
</pallas_src>

<mosaic_0001>
module attributes {stable_mosaic.version = 11 : i64} {
  func.func @_mha_kernel(%arg0: i32, %arg1: i32, %arg2: memref<1x8x32xbf16, #tpu.memory_space<vmem>>, %arg3: memref<1x8x32xbf16, #tpu.memory_space<vmem>>, %arg4: memref<1x8x32xbf16, #tpu.memory_space<vmem>>, %arg5: memref<1x8x1xf32, #tpu.memory_space<vmem>>, %arg6: memref<32x32xbf16, #tpu.memory_space<vmem>>, %arg7: memref<1x32xf32, #tpu.memory_space<vmem>>, %arg8: memref<32x32xbf16, #tpu.memory_space<vmem>>, %arg9: memref<1x32xf32, #tpu.memory_space<vmem>>, %arg10: memref<32x32xbf16, #tpu.memory_space<vmem>>, %arg11: memref<1x32xf32, #tpu.memory_space<vmem>>, %arg12: memref<1x8x32xf32, #tpu.memory_space<vmem>>, %arg13: memref<8x32xbf16, #tpu.memory_space<vmem>>, %arg14: memref<8x32xbf16, #tpu.memory_space<vmem>>) attributes {dimension_semantics = [#tpu.dimension_semantics<parallel>, #tpu.dimension_semantics<arbitrary>], iteration_bounds = array<i64: 2, 1>, scalar_prefetch = 0 : i64, scratch_operands = 2 : i64, tpu.core_type = #tpu.core_type<tc>, window_params = [{transform_indices = @transform_0, window_bounds = array<i64: 1, 8, 32>}, {transform_indices = @transform_1, window_bounds = array<i64: 1, 8, 32>}, {transform_indices = @transform_2, window_bounds = array<i64: 1, 8, 32>}, {transform_indices = @transform_3, window_bounds = array<i64: 1, 8, 1>}, {pipeline_mode = #tpu.pipeline_mode<synchronous>, transform_indices = @transform_4, window_bounds = array<i64: 32, 32>}, {pipeline_mode = #tpu.pipeline_mode<synchronous>, transform_indices = @transform_5, window_bounds = array<i64: 1, 32>}, {pipeline_mode = #tpu.pipeline_mode<synchronous>, transform_indices = @transform_6, window_bounds = array<i64: 32, 32>}, {pipeline_mode = #tpu.pipeline_mode<synchronous>, transform_indices = @transform_7, window_bounds = array<i64: 1, 32>}, {pipeline_mode = #tpu.pipeline_mode<synchronous>, transform_indices = @transform_8, window_bounds = array<i64: 32, 32>}, {pipeline_mode = #tpu.pipeline_mode<synchronous>, transform_indices = @transform_9, window_bounds = array<i64: 1, 32>}, {transform_indices = @transform_10, window_bounds = array<i64: 1, 8, 32>}]} {
    %c0_i32 = arith.constant 0 : i32
    %0 = arith.cmpi eq, %arg1, %c0_i32 : i32
    %1 = arith.extui %0 : i1 to i32
    %c0_i32_0 = arith.constant 0 : i32
    %2 = arith.cmpi ne, %1, %c0_i32_0 : i32
    scf.if %2 {
      %c0_42 = arith.constant 0 : index
      %c0_43 = arith.constant 0 : index
      %c0_44 = arith.constant 0 : index
      %85 = vector.load %arg3[%c0_42, %c0_43, %c0_44] : memref<1x8x32xbf16, #tpu.memory_space<vmem>>, vector<1x8x32xbf16>
      %86 = vector.shape_cast %85 : vector<1x8x32xbf16> to vector<8x32xbf16>
      %c0_45 = arith.constant 0 : index
      %c0_46 = arith.constant 0 : index
      %c0_47 = arith.constant 0 : index
      %87 = vector.load %arg4[%c0_45, %c0_46, %c0_47] : memref<1x8x32xbf16, #tpu.memory_space<vmem>>, vector<1x8x32xbf16>
      %88 = vector.shape_cast %87 : vector<1x8x32xbf16> to vector<8x32xbf16>
      %c0_48 = arith.constant 0 : index
      %c0_49 = arith.constant 0 : index
      %89 = vector.load %arg8[%c0_48, %c0_49] : memref<32x32xbf16, #tpu.memory_space<vmem>>, vector<32x32xbf16>
      %cst_50 = arith.constant dense<0.000000e+00> : vector<8x32xf32>
      %90 = tpu.matmul %86, %89, %cst_50 {dimension_numbers = #tpu.dot_dimension_numbers<[1], [0], [0], [1], [0, 0, 1, 1], [], []>} : vector<8x32xbf16>, vector<32x32xbf16>, vector<8x32xf32> -> vector<8x32xf32>
      %c0_51 = arith.constant 0 : index
      %c0_52 = arith.constant 0 : index
      %91 = vector.load %arg9[%c0_51, %c0_52] : memref<1x32xf32, #tpu.memory_space<vmem>>, vector<1x32xf32>
      %92 = vector.broadcast %91 : vector<1x32xf32> to vector<8x32xf32>
      %93 = arith.addf %90, %92 : vector<8x32xf32>
      %c0_53 = arith.constant 0 : index
      %c0_54 = arith.constant 0 : index
      %94 = vector.load %arg10[%c0_53, %c0_54] : memref<32x32xbf16, #tpu.memory_space<vmem>>, vector<32x32xbf16>
      %cst_55 = arith.constant dense<0.000000e+00> : vector<8x32xf32>
      %95 = tpu.matmul %88, %94, %cst_55 {dimension_numbers = #tpu.dot_dimension_numbers<[1], [0], [0], [1], [0, 0, 1, 1], [], []>} : vector<8x32xbf16>, vector<32x32xbf16>, vector<8x32xf32> -> vector<8x32xf32>
      %c0_56 = arith.constant 0 : index
      %c0_57 = arith.constant 0 : index
      %96 = vector.load %arg11[%c0_56, %c0_57] : memref<1x32xf32, #tpu.memory_space<vmem>>, vector<1x32xf32>
      %97 = vector.broadcast %96 : vector<1x32xf32> to vector<8x32xf32>
      %98 = arith.addf %95, %97 : vector<8x32xf32>
      %99 = arith.truncf %93 : vector<8x32xf32> to vector<8x32xbf16>
      %c0_58 = arith.constant 0 : index
      %c0_59 = arith.constant 0 : index
      %100 = vector.load %arg13[%c0_58, %c0_59] : memref<8x32xbf16, #tpu.memory_space<vmem>>, vector<8x32xbf16>
      tpu.vector_store %arg13[%c0_58, %c0_59], %99 {strides = array<i32>} : memref<8x32xbf16, #tpu.memory_space<vmem>>, vector<8x32xbf16>,
      %101 = arith.truncf %98 : vector<8x32xf32> to vector<8x32xbf16>
      %c0_60 = arith.constant 0 : index
      %c0_61 = arith.constant 0 : index
      %102 = vector.load %arg14[%c0_60, %c0_61] : memref<8x32xbf16, #tpu.memory_space<vmem>>, vector<8x32xbf16>
      tpu.vector_store %arg14[%c0_60, %c0_61], %101 {strides = array<i32>} : memref<8x32xbf16, #tpu.memory_space<vmem>>, vector<8x32xbf16>,
    } else {
    }
    %c0 = arith.constant 0 : index
    %c0_1 = arith.constant 0 : index
    %c0_2 = arith.constant 0 : index
    %3 = vector.load %arg2[%c0, %c0_1, %c0_2] : memref<1x8x32xbf16, #tpu.memory_space<vmem>>, vector<1x8x32xbf16>
    %4 = vector.shape_cast %3 : vector<1x8x32xbf16> to vector<8x32xbf16>
    %c0_3 = arith.constant 0 : index
    %c0_4 = arith.constant 0 : index
    %5 = vector.load %arg6[%c0_3, %c0_4] : memref<32x32xbf16, #tpu.memory_space<vmem>>, vector<32x32xbf16>
    %cst = arith.constant dense<0.000000e+00> : vector<8x32xf32>
    %6 = tpu.matmul %4, %5, %cst {dimension_numbers = #tpu.dot_dimension_numbers<[1], [0], [0], [1], [0, 0, 1, 1], [], []>} : vector<8x32xbf16>, vector<32x32xbf16>, vector<8x32xf32> -> vector<8x32xf32>
    %c0_5 = arith.constant 0 : index
    %c0_6 = arith.constant 0 : index
    %7 = vector.load %arg7[%c0_5, %c0_6] : memref<1x32xf32, #tpu.memory_space<vmem>>, vector<1x32xf32>
    %8 = vector.broadcast %7 : vector<1x32xf32> to vector<8x32xf32>
    %9 = arith.addf %6, %8 : vector<8x32xf32>
    %10 = arith.truncf %9 : vector<8x32xf32> to vector<8x32xbf16>
    %c0_7 = arith.constant 0 : index
    %c0_8 = arith.constant 0 : index
    %c0_9 = arith.constant 0 : index
    %11 = vector.load %arg5[%c0_7, %c0_8, %c0_9] : memref<1x8x1xf32, #tpu.memory_space<vmem>>, vector<1x8x1xf32>
    %12 = vector.shape_cast %11 : vector<1x8x1xf32> to vector<8x1xf32>
    %13 = vector.extract_strided_slice %10 {offsets = [0, 0], sizes = [8, 8], strides = [1, 1]} : vector<8x32xbf16> to vector<8x8xbf16>
    %c0_10 = arith.constant 0 : index
    %c0_11 = arith.constant 0 : index
    %14 = vector.load %arg13[%c0_10, %c0_11] : memref<8x32xbf16, #tpu.memory_space<vmem>>, vector<8x8xbf16>
    %c0_12 = arith.constant 0 : index
    %c0_13 = arith.constant 0 : index
    %15 = vector.load %arg14[%c0_12, %c0_13] : memref<8x32xbf16, #tpu.memory_space<vmem>>, vector<8x8xbf16>
    %cst_14 = arith.constant dense<0.000000e+00> : vector<8x8xf32>
    %16 = tpu.matmul %13, %14, %cst_14 {dimension_numbers = #tpu.dot_dimension_numbers<[1], [1], [0], [0], [0, 0, 1, 0], [], []>} : vector<8x8xbf16>, vector<8x8xbf16>, vector<8x8xf32> -> vector<8x8xf32>
    %cst_15 = arith.constant dense<0xFF800000> : vector<8xf32>
    %17 = vector.multi_reduction <maximumf>, %16, %cst_15 [1] : vector<8x8xf32> to vector<8xf32>
    %18 = vector.shape_cast %17 : vector<8xf32> to vector<8x1xf32>
    %19 = vector.broadcast %18 : vector<8x1xf32> to vector<8x8xf32>
    %20 = arith.subf %16, %19 : vector<8x8xf32>
    %21 = math.exp %20 : vector<8x8xf32>
    %cst_16 = arith.constant dense<0.000000e+00> : vector<8xf32>
    %22 = vector.multi_reduction <add>, %21, %cst_16 [1] : vector<8x8xf32> to vector<8xf32>
    %23 = vector.shape_cast %22 : vector<8xf32> to vector<8x1xf32>
    %24 = tpu.reciprocal %23 {approx = true} : vector<8x1xf32> -> vector<8x1xf32>
    %25 = arith.truncf %21 : vector<8x8xf32> to vector<8x8xbf16>
    %cst_17 = arith.constant dense<0.000000e+00> : vector<8x8xf32>
    %26 = tpu.matmul %25, %15, %cst_17 {dimension_numbers = #tpu.dot_dimension_numbers<[1], [0], [0], [1], [0, 0, 1, 1], [], []>} : vector<8x8xbf16>, vector<8x8xbf16>, vector<8x8xf32> -> vector<8x8xf32>
    %27 = arith.mulf %24, %12 : vector<8x1xf32>
    %28 = vector.broadcast %27 : vector<8x1xf32> to vector<8x8xf32>
    %29 = arith.mulf %26, %28 : vector<8x8xf32>
    %30 = vector.extract_strided_slice %10 {offsets = [0, 8], sizes = [8, 8], strides = [1, 1]} : vector<8x32xbf16> to vector<8x8xbf16>
    %c0_18 = arith.constant 0 : index
    %c8 = arith.constant 8 : index
    %31 = vector.load %arg13[%c0_18, %c8] : memref<8x32xbf16, #tpu.memory_space<vmem>>, vector<8x8xbf16>
    %c0_19 = arith.constant 0 : index
    %c8_20 = arith.constant 8 : index
    %32 = vector.load %arg14[%c0_19, %c8_20] : memref<8x32xbf16, #tpu.memory_space<vmem>>, vector<8x8xbf16>
    %cst_21 = arith.constant dense<0.000000e+00> : vector<8x8xf32>
    %33 = tpu.matmul %30, %31, %cst_21 {dimension_numbers = #tpu.dot_dimension_numbers<[1], [1], [0], [0], [0, 0, 1, 0], [], []>} : vector<8x8xbf16>, vector<8x8xbf16>, vector<8x8xf32> -> vector<8x8xf32>
    %cst_22 = arith.constant dense<0xFF800000> : vector<8xf32>
    %34 = vector.multi_reduction <maximumf>, %33, %cst_22 [1] : vector<8x8xf32> to vector<8xf32>
    %35 = vector.shape_cast %34 : vector<8xf32> to vector<8x1xf32>
    %36 = vector.broadcast %35 : vector<8x1xf32> to vector<8x8xf32>
    %37 = arith.subf %33, %36 : vector<8x8xf32>
    %38 = math.exp %37 : vector<8x8xf32>
    %cst_23 = arith.constant dense<0.000000e+00> : vector<8xf32>
    %39 = vector.multi_reduction <add>, %38, %cst_23 [1] : vector<8x8xf32> to vector<8xf32>
    %40 = vector.shape_cast %39 : vector<8xf32> to vector<8x1xf32>
    %41 = tpu.reciprocal %40 {approx = true} : vector<8x1xf32> -> vector<8x1xf32>
    %42 = arith.truncf %38 : vector<8x8xf32> to vector<8x8xbf16>
    %cst_24 = arith.constant dense<0.000000e+00> : vector<8x8xf32>
    %43 = tpu.matmul %42, %32, %cst_24 {dimension_numbers = #tpu.dot_dimension_numbers<[1], [0], [0], [1], [0, 0, 1, 1], [], []>} : vector<8x8xbf16>, vector<8x8xbf16>, vector<8x8xf32> -> vector<8x8xf32>
    %44 = arith.mulf %41, %12 : vector<8x1xf32>
    %45 = vector.broadcast %44 : vector<8x1xf32> to vector<8x8xf32>
    %46 = arith.mulf %43, %45 : vector<8x8xf32>
    %47 = vector.extract_strided_slice %10 {offsets = [0, 16], sizes = [8, 8], strides = [1, 1]} : vector<8x32xbf16> to vector<8x8xbf16>
    %c0_25 = arith.constant 0 : index
    %c16 = arith.constant 16 : index
    %48 = vector.load %arg13[%c0_25, %c16] : memref<8x32xbf16, #tpu.memory_space<vmem>>, vector<8x8xbf16>
    %c0_26 = arith.constant 0 : index
    %c16_27 = arith.constant 16 : index
    %49 = vector.load %arg14[%c0_26, %c16_27] : memref<8x32xbf16, #tpu.memory_space<vmem>>, vector<8x8xbf16>
    %cst_28 = arith.constant dense<0.000000e+00> : vector<8x8xf32>
    %50 = tpu.matmul %47, %48, %cst_28 {dimension_numbers = #tpu.dot_dimension_numbers<[1], [1], [0], [0], [0, 0, 1, 0], [], []>} : vector<8x8xbf16>, vector<8x8xbf16>, vector<8x8xf32> -> vector<8x8xf32>
    %cst_29 = arith.constant dense<0xFF800000> : vector<8xf32>
    %51 = vector.multi_reduction <maximumf>, %50, %cst_29 [1] : vector<8x8xf32> to vector<8xf32>
    %52 = vector.shape_cast %51 : vector<8xf32> to vector<8x1xf32>
    %53 = vector.broadcast %52 : vector<8x1xf32> to vector<8x8xf32>
    %54 = arith.subf %50, %53 : vector<8x8xf32>
    %55 = math.exp %54 : vector<8x8xf32>
    %cst_30 = arith.constant dense<0.000000e+00> : vector<8xf32>
    %56 = vector.multi_reduction <add>, %55, %cst_30 [1] : vector<8x8xf32> to vector<8xf32>
    %57 = vector.shape_cast %56 : vector<8xf32> to vector<8x1xf32>
    %58 = tpu.reciprocal %57 {approx = true} : vector<8x1xf32> -> vector<8x1xf32>
    %59 = arith.truncf %55 : vector<8x8xf32> to vector<8x8xbf16>
    %cst_31 = arith.constant dense<0.000000e+00> : vector<8x8xf32>
    %60 = tpu.matmul %59, %49, %cst_31 {dimension_numbers = #tpu.dot_dimension_numbers<[1], [0], [0], [1], [0, 0, 1, 1], [], []>} : vector<8x8xbf16>, vector<8x8xbf16>, vector<8x8xf32> -> vector<8x8xf32>
    %61 = arith.mulf %58, %12 : vector<8x1xf32>
    %62 = vector.broadcast %61 : vector<8x1xf32> to vector<8x8xf32>
    %63 = arith.mulf %60, %62 : vector<8x8xf32>
    %64 = vector.extract_strided_slice %10 {offsets = [0, 24], sizes = [8, 8], strides = [1, 1]} : vector<8x32xbf16> to vector<8x8xbf16>
    %c0_32 = arith.constant 0 : index
    %c24 = arith.constant 24 : index
    %65 = vector.load %arg13[%c0_32, %c24] : memref<8x32xbf16, #tpu.memory_space<vmem>>, vector<8x8xbf16>
    %c0_33 = arith.constant 0 : index
    %c24_34 = arith.constant 24 : index
    %66 = vector.load %arg14[%c0_33, %c24_34] : memref<8x32xbf16, #tpu.memory_space<vmem>>, vector<8x8xbf16>
    %cst_35 = arith.constant dense<0.000000e+00> : vector<8x8xf32>
    %67 = tpu.matmul %64, %65, %cst_35 {dimension_numbers = #tpu.dot_dimension_numbers<[1], [1], [0], [0], [0, 0, 1, 0], [], []>} : vector<8x8xbf16>, vector<8x8xbf16>, vector<8x8xf32> -> vector<8x8xf32>
    %cst_36 = arith.constant dense<0xFF800000> : vector<8xf32>
    %68 = vector.multi_reduction <maximumf>, %67, %cst_36 [1] : vector<8x8xf32> to vector<8xf32>
    %69 = vector.shape_cast %68 : vector<8xf32> to vector<8x1xf32>
    %70 = vector.broadcast %69 : vector<8x1xf32> to vector<8x8xf32>
    %71 = arith.subf %67, %70 : vector<8x8xf32>
    %72 = math.exp %71 : vector<8x8xf32>
    %cst_37 = arith.constant dense<0.000000e+00> : vector<8xf32>
    %73 = vector.multi_reduction <add>, %72, %cst_37 [1] : vector<8x8xf32> to vector<8xf32>
    %74 = vector.shape_cast %73 : vector<8xf32> to vector<8x1xf32>
    %75 = tpu.reciprocal %74 {approx = true} : vector<8x1xf32> -> vector<8x1xf32>
    %76 = arith.truncf %72 : vector<8x8xf32> to vector<8x8xbf16>
    %cst_38 = arith.constant dense<0.000000e+00> : vector<8x8xf32>
    %77 = tpu.matmul %76, %66, %cst_38 {dimension_numbers = #tpu.dot_dimension_numbers<[1], [0], [0], [1], [0, 0, 1, 1], [], []>} : vector<8x8xbf16>, vector<8x8xbf16>, vector<8x8xf32> -> vector<8x8xf32>
    %78 = arith.mulf %75, %12 : vector<8x1xf32>
    %79 = vector.broadcast %78 : vector<8x1xf32> to vector<8x8xf32>
    %80 = arith.mulf %77, %79 : vector<8x8xf32>
    %81 = tpu.concatenate %29, %46, %63, %80 in 1 : vector<8x8xf32>, vector<8x8xf32>, vector<8x8xf32>, vector<8x8xf32> -> vector<8x32xf32>
    %c0_39 = arith.constant 0 : index
    %c0_40 = arith.constant 0 : index
    %c0_41 = arith.constant 0 : index
    %82 = vector.load %arg12[%c0_39, %c0_40, %c0_41] : memref<1x8x32xf32, #tpu.memory_space<vmem>>, vector<1x8x32xf32>
    %83 = vector.shape_cast %82 : vector<1x8x32xf32> to vector<8x32xf32>
    %84 = vector.shape_cast %81 : vector<8x32xf32> to vector<1x8x32xf32>
    tpu.vector_store %arg12[%c0_39, %c0_40, %c0_41], %84 {strides = array<i32>} : memref<1x8x32xf32, #tpu.memory_space<vmem>>, vector<1x8x32xf32>,
    return
  }
  func.func @transform_0(%arg0: i32, %arg1: i32) -> (i32, i32, i32) {
    %c0_i32 = arith.constant 0 : i32
    %c0_i32_0 = arith.constant 0 : i32
    return %arg0, %arg1, %c0_i32 : i32, i32, i32
  }
  func.func @transform_1(%arg0: i32, %arg1: i32) -> (i32, i32, i32) {
    %c0_i32 = arith.constant 0 : i32
    %c0_i32_0 = arith.constant 0 : i32
    %c0_i32_1 = arith.constant 0 : i32
    return %arg0, %c0_i32, %c0_i32_0 : i32, i32, i32
  }
  func.func @transform_2(%arg0: i32, %arg1: i32) -> (i32, i32, i32) {
    %c0_i32 = arith.constant 0 : i32
    %c0_i32_0 = arith.constant 0 : i32
    %c0_i32_1 = arith.constant 0 : i32
    return %arg0, %c0_i32, %c0_i32_0 : i32, i32, i32
  }
  func.func @transform_3(%arg0: i32, %arg1: i32) -> (i32, i32, i32) {
    %c0_i32 = arith.constant 0 : i32
    %c0_i32_0 = arith.constant 0 : i32
    return %arg0, %arg1, %c0_i32 : i32, i32, i32
  }
  func.func @transform_4(%arg0: i32, %arg1: i32) -> (i32, i32) {
    %c0_i32 = arith.constant 0 : i32
    %c0_i32_0 = arith.constant 0 : i32
    %c0_i32_1 = arith.constant 0 : i32
    return %c0_i32, %c0_i32_0 : i32, i32
  }
  func.func @transform_5(%arg0: i32, %arg1: i32) -> (i32, i32) {
    %c0_i32 = arith.constant 0 : i32
    %c0_i32_0 = arith.constant 0 : i32
    %c0_i32_1 = arith.constant 0 : i32
    return %c0_i32, %c0_i32_0 : i32, i32
  }
  func.func @transform_6(%arg0: i32, %arg1: i32) -> (i32, i32) {
    %c0_i32 = arith.constant 0 : i32
    %c0_i32_0 = arith.constant 0 : i32
    %c0_i32_1 = arith.constant 0 : i32
    return %c0_i32, %c0_i32_0 : i32, i32
  }
  func.func @transform_7(%arg0: i32, %arg1: i32) -> (i32, i32) {
    %c0_i32 = arith.constant 0 : i32
    %c0_i32_0 = arith.constant 0 : i32
    %c0_i32_1 = arith.constant 0 : i32
    return %c0_i32, %c0_i32_0 : i32, i32
  }
  func.func @transform_8(%arg0: i32, %arg1: i32) -> (i32, i32) {
    %c0_i32 = arith.constant 0 : i32
    %c0_i32_0 = arith.constant 0 : i32
    %c0_i32_1 = arith.constant 0 : i32
    return %c0_i32, %c0_i32_0 : i32, i32
  }
  func.func @transform_9(%arg0: i32, %arg1: i32) -> (i32, i32) {
    %c0_i32 = arith.constant 0 : i32
    %c0_i32_0 = arith.constant 0 : i32
    %c0_i32_1 = arith.constant 0 : i32
    return %c0_i32, %c0_i32_0 : i32, i32
  }
  func.func @transform_10(%arg0: i32, %arg1: i32) -> (i32, i32, i32) {
    %c0_i32 = arith.constant 0 : i32
    %c0_i32_0 = arith.constant 0 : i32
    return %arg0, %arg1, %c0_i32 : i32, i32, i32
  }
}

</mosaic_0001>

<llo_original>
// kernel: tpu_custom_call.1
$region0: #{tpu_custom_call.1}
  #allocation0 [shape = 'u32[]', space=smem, size = 0x4, offset = 0x4, fixed_abs, tag = 'smem constant byte address 0x4 - core index']
  #allocation1 [shape = 'u32[144,128]{1,0:T(1,128)}', space=vmem, size = 0x12000, scoped, tag = 'internal scratch']
  #allocation2 [shape = 'bf16[8,32]{1,0:T(8,128)(2,1)}', space=vmem, size = 0x800, scoped, tag = 'scratch operand']
  #allocation3 [shape = 'bf16[8,32]{1,0:T(8,128)(2,1)}', space=vmem, size = 0x800, scoped, tag = 'scratch operand']
  %s0 = inlined_call_operand.hbm [shape: bf16[2,8,32], index: 0, kind: input, shape index: {}]
  %s1 = inlined_call_operand.hbm [shape: bf16[2,8,32], index: 1, kind: input, shape index: {}]
  %s2 = inlined_call_operand.hbm [shape: bf16[2,8,32], index: 2, kind: input, shape index: {}]
  %s3 = inlined_call_operand.vmem [shape: f32[2,8,1], index: 3, kind: input, shape index: {}]
  %s4 = inlined_call_operand.vmem [shape: bf16[32,32], index: 4, kind: input, shape index: {}]
  %s5 = inlined_call_operand.hbm [shape: f32[1,32], index: 5, kind: input, shape index: {}]
  %s6 = inlined_call_operand.vmem [shape: bf16[32,32], index: 6, kind: input, shape index: {}]
  %s7 = inlined_call_operand.hbm [shape: f32[1,32], index: 7, kind: input, shape index: {}]
  %s8 = inlined_call_operand.vmem [shape: bf16[32,32], index: 8, kind: input, shape index: {}]
  %s9 = inlined_call_operand.vmem [shape: f32[1,32], index: 9, kind: input, shape index: {}]
  %s10 = inlined_call_operand.hbm [shape: f32[2,8,32], index: 10, kind: output, shape index: {}]
  %s11 = sld [smem:[#allocation0]]
  $region97: #{tpu_custom_call.1} parent=0
    _
  %s13 = ssub.s32 1, %s11
  %s14 = scalar_select 0, %s13, %s11
  $region1: #{tpu_custom_call.1} parent=0
    #allocation4 [shape = 'u8[4096]{0}', space=vmem, size = 0x1000, scoped, tag = 'input window, operand 0']
    #allocation5 [shape = 's32[2]{0}', space=sflag, size = 0x8, scoped, tag = 'scoped memory for tpu_custom_call.1']
    #allocation6 [shape = 's32[2]{0}', space=sflag, size = 0x8, scoped, tag = 'scoped memory for tpu_custom_call.1']
    #allocation7 [shape = 'u8[4096]{0}', space=vmem, size = 0x1000, scoped, tag = 'input window, operand 1']
    #allocation8 [shape = 's32[2]{0}', space=sflag, size = 0x8, scoped, tag = 'scoped memory for tpu_custom_call.1']
    #allocation9 [shape = 'u8[4096]{0}', space=vmem, size = 0x1000, scoped, tag = 'input window, operand 2']
    #allocation10 [shape = 'u8[512]{0}', space=vmem, size = 0x400, scoped, tag = 'input window, operand 5, single buffered']
    #allocation11 [shape = 's32[1]{0}', space=sflag, size = 0x4, scoped, tag = 'scoped memory for tpu_custom_call.1']
    #allocation12 [shape = 'u8[512]{0}', space=vmem, size = 0x400, scoped, tag = 'input window, operand 7, single buffered']
    #allocation13 [shape = 'u8[8192]{0}', space=vmem, size = 0x2000, scoped, tag = 'output window, operand 0']
    %15 = vsyncpa [#allocation5], 0
    %s16 = scalar_lea.sflag [#allocation5], 1
    %17 = vsyncpa %s16, 0
    %18 = vsyncpa [#allocation8], 0
    %s19 = scalar_lea.sflag [#allocation8], 1
    %20 = vsyncpa %s19, 0
    %21 = vsyncpa [#allocation11], 0
    %22 = vsyncpa [#allocation6], 0
    %s23 = scalar_lea.sflag [#allocation6], 1
    %24 = vsyncpa %s23, 0
    loop: start=0, step=1, limit=4
    $region2: #{tpu_custom_call.1} parent=1 // loop_pre_header
      _
    $region3: #{tpu_custom_call.1} parent=1 // loop_header
      %s26 = sphi 0, %s30
      %p27 = scmp.ge.s32.totalorder %s26, 4
      %s33 = sphi 0, %s45
      %s34 = sphi 0, %s41
      %s35 = sphi 0, %s33
      %s36 = sphi 0, %s34
      %s37 = sphi 0, %s35
      %s38 = sphi 0, %s36
      %s50 = sphi 0, %s52
      %s53 = sphi 0, %s50
      %s54 = sphi 0, %s53
      %s70 = sphi 0, %s54
      %s76 = sphi 0, %s78
      %s79 = sphi 0, %s76
      %s80 = sphi 0, %s79
      %s96 = sphi 0, %s80
      %s102 = sphi 0, %s104
      %s105 = sphi 0, %s102
      %s106 = sphi 0, %s105
      %s122 = sphi 0, %s106
      %s130 = sphi 0, %s132
      %s133 = sphi 0, %s130
      %s134 = sphi 0, %s133
      %s150 = sphi 0, %s134
      %s154 = sphi 0, %s154
      %s156 = sphi 0, %s154
      %s157 = sphi 0, %s156
      %s171 = sphi 0, %s157
      %s175 = sphi 0, %s175
      %s177 = sphi 0, %s175
      %s178 = sphi 0, %s177
      %s192 = sphi 0, %s178
      %s196 = sphi 0, %s196
      %s198 = sphi 0, %s196
      %s199 = sphi 0, %s198
      %s213 = sphi 0, %s199
      %s217 = sphi 0, %s217
      %s219 = sphi 0, %s217
      %s220 = sphi 0, %s219
      %s234 = sphi 0, %s220
      %s238 = sphi 0, %s238
      %s240 = sphi 0, %s238
      %s241 = sphi 0, %s240
      %s255 = sphi 0, %s241
      %s259 = sphi 0, %s259
      %s261 = sphi 0, %s259
      %s262 = sphi 0, %s261
      %s276 = sphi 0, %s262
      %s284 = sphi 0, %s286
      %s287 = sphi 0, %s284
      %s288 = sphi 0, %s287
      %s304 = sphi 0, %s288
    $region4: #{tpu_custom_call.1} parent=1 // loop_header_branch
      %29 = sbr.rel (%p27) target = $region8
    $region5: #{tpu_custom_call.1} parent=1 // loop_body
      %s31 = ssub.s32 %s26, 1
      %s32 = ssub.s32 %s26, 2
      %s39 = sadd.s32 1, %s34
      %p40 = scmp.ge.s32.totalorder %s39, 1
      %s41 = scalar_select %p40, 0, %s39
      %s42 = sadd.s32 1, %s33
      %s43 = scalar_select %p40, %s42, %s33
      %p44 = scmp.ge.s32.totalorder %s43, 2
      %s45 = scalar_select %p44, 0, %s43
      %s46 = ssub.s32 %s33, %s45
      %s47 = ssub.s32 %s34, %s41
      %s48 = sor.u32 %s46, %s47
      %p49 = scmp.eq.s32.totalorder %s48, 0
      %s51 = sadd.s32 %s50, 1
      %s52 = scalar_select %p49, %s50, %s51
      %p55 = pneg %p49
      %p56 = scmp.eq.s32.totalorder %s26, 1
      %p57 = por %p55, %p56
      %p58 = scmp.ne.s32.totalorder %s50, %s53
      %p59 = scmp.eq.s32.totalorder %s26, 0
      %p60 = por %p58, %p59
      %p61 = scmp.ne.s32.totalorder %s50, %s53
      %p62 = scmp.eq.s32.totalorder %s31, 1
      %p63 = por %p61, %p62
      %p64 = scmp.ne.s32.totalorder %s53, %s54
      %p65 = scmp.eq.s32.totalorder %s31, 0
      %p66 = por %p64, %p65
      %p67 = scmp.ne.s32.totalorder %s53, %s54
      %p68 = scmp.eq.s32.totalorder %s32, 1
      %p69 = por %p67, %p68
      %p71 = scmp.ne.s32.totalorder %s54, %s70
      %p72 = scmp.eq.s32.totalorder %s32, 0
      %p73 = por %p71, %p72
      %s74 = ssub.s32 %s33, %s45
      %p75 = scmp.eq.s32.totalorder %s74, 0
      %s77 = sadd.s32 %s76, 1
      %s78 = scalar_select %p75, %s76, %s77
      %p81 = pneg %p75
      %p82 = scmp.eq.s32.totalorder %s26, 1
      %p83 = por %p81, %p82
      %p84 = scmp.ne.s32.totalorder %s76, %s79
      %p85 = scmp.eq.s32.totalorder %s26, 0
      %p86 = por %p84, %p85
      %p87 = scmp.ne.s32.totalorder %s76, %s79
      %p88 = scmp.eq.s32.totalorder %s31, 1
      %p89 = por %p87, %p88
      %p90 = scmp.ne.s32.totalorder %s79, %s80
      %p91 = scmp.eq.s32.totalorder %s31, 0
      %p92 = por %p90, %p91
      %p93 = scmp.ne.s32.totalorder %s79, %s80
      %p94 = scmp.eq.s32.totalorder %s32, 1
      %p95 = por %p93, %p94
      %p97 = scmp.ne.s32.totalorder %s80, %s96
      %p98 = scmp.eq.s32.totalorder %s32, 0
      %p99 = por %p97, %p98
      %s100 = ssub.s32 %s33, %s45
      %p101 = scmp.eq.s32.totalorder %s100, 0
      %s103 = sadd.s32 %s102, 1
      %s104 = scalar_select %p101, %s102, %s103
      %p107 = pneg %p101
      %p108 = scmp.eq.s32.totalorder %s26, 1
      %p109 = por %p107, %p108
      %p110 = scmp.ne.s32.totalorder %s102, %s105
      %p111 = scmp.eq.s32.totalorder %s26, 0
      %p112 = por %p110, %p111
      %p113 = scmp.ne.s32.totalorder %s102, %s105
      %p114 = scmp.eq.s32.totalorder %s31, 1
      %p115 = por %p113, %p114
      %p116 = scmp.ne.s32.totalorder %s105, %s106
      %p117 = scmp.eq.s32.totalorder %s31, 0
      %p118 = por %p116, %p117
      %p119 = scmp.ne.s32.totalorder %s105, %s106
      %p120 = scmp.eq.s32.totalorder %s32, 1
      %p121 = por %p119, %p120
      %p123 = scmp.ne.s32.totalorder %s106, %s122
      %p124 = scmp.eq.s32.totalorder %s32, 0
      %p125 = por %p123, %p124
      %s126 = ssub.s32 %s33, %s45
      %s127 = ssub.s32 %s34, %s41
      %s128 = sor.u32 %s126, %s127
      %p129 = scmp.eq.s32.totalorder %s128, 0
      %s131 = sadd.s32 %s130, 1
      %s132 = scalar_select %p129, %s130, %s131
      %p135 = pneg %p129
      %p136 = scmp.eq.s32.totalorder %s26, 1
      %p137 = por %p135, %p136
      %p138 = scmp.ne.s32.totalorder %s130, %s133
      %p139 = scmp.eq.s32.totalorder %s26, 0
      %p140 = por %p138, %p139
      %p141 = scmp.ne.s32.totalorder %s130, %s133
      %p142 = scmp.eq.s32.totalorder %s31, 1
      %p143 = por %p141, %p142
      %p144 = scmp.ne.s32.totalorder %s133, %s134
      %p145 = scmp.eq.s32.totalorder %s31, 0
      %p146 = por %p144, %p145
      %p147 = scmp.ne.s32.totalorder %s133, %s134
      %p148 = scmp.eq.s32.totalorder %s32, 1
      %p149 = por %p147, %p148
      %p151 = scmp.ne.s32.totalorder %s134, %s150
      %p152 = scmp.eq.s32.totalorder %s32, 0
      %p153 = por %p151, %p152
      %s155 = sadd.s32 %s154, 1
      %p158 = scmp.eq.s32.totalorder %s26, 1
      %p159 = scmp.ne.s32.totalorder %s154, %s156
      %p160 = scmp.eq.s32.totalorder %s26, 0
      %p161 = por %p159, %p160
      %p162 = scmp.ne.s32.totalorder %s154, %s156
      %p163 = scmp.eq.s32.totalorder %s31, 1
      %p164 = por %p162, %p163
      %p165 = scmp.ne.s32.totalorder %s156, %s157
      %p166 = scmp.eq.s32.totalorder %s31, 0
      %p167 = por %p165, %p166
      %p168 = scmp.ne.s32.totalorder %s156, %s157
      %p169 = scmp.eq.s32.totalorder %s32, 1
      %p170 = por %p168, %p169
      %p172 = scmp.ne.s32.totalorder %s157, %s171
      %p173 = scmp.eq.s32.totalorder %s32, 0
      %p174 = por %p172, %p173
      %s176 = sadd.s32 %s175, 1
      %p179 = scmp.eq.s32.totalorder %s26, 1
      %p180 = scmp.ne.s32.totalorder %s175, %s177
      %p181 = scmp.eq.s32.totalorder %s26, 0
      %p182 = por %p180, %p181
      %p183 = scmp.ne.s32.totalorder %s175, %s177
      %p184 = scmp.eq.s32.totalorder %s31, 1
      %p185 = por %p183, %p184
      %p186 = scmp.ne.s32.totalorder %s177, %s178
      %p187 = scmp.eq.s32.totalorder %s31, 0
      %p188 = por %p186, %p187
      %p189 = scmp.ne.s32.totalorder %s177, %s178
      %p190 = scmp.eq.s32.totalorder %s32, 1
      %p191 = por %p189, %p190
      %p193 = scmp.ne.s32.totalorder %s178, %s192
      %p194 = scmp.eq.s32.totalorder %s32, 0
      %p195 = por %p193, %p194
      %s197 = sadd.s32 %s196, 1
      %p200 = scmp.eq.s32.totalorder %s26, 1
      %p201 = scmp.ne.s32.totalorder %s196, %s198
      %p202 = scmp.eq.s32.totalorder %s26, 0
      %p203 = por %p201, %p202
      %p204 = scmp.ne.s32.totalorder %s196, %s198
      %p205 = scmp.eq.s32.totalorder %s31, 1
      %p206 = por %p204, %p205
      %p207 = scmp.ne.s32.totalorder %s198, %s199
      %p208 = scmp.eq.s32.totalorder %s31, 0
      %p209 = por %p207, %p208
      %p210 = scmp.ne.s32.totalorder %s198, %s199
      %p211 = scmp.eq.s32.totalorder %s32, 1
      %p212 = por %p210, %p211
      %p214 = scmp.ne.s32.totalorder %s199, %s213
      %p215 = scmp.eq.s32.totalorder %s32, 0
      %p216 = por %p214, %p215
      %s218 = sadd.s32 %s217, 1
      %p221 = scmp.eq.s32.totalorder %s26, 1
      %p222 = scmp.ne.s32.totalorder %s217, %s219
      %p223 = scmp.eq.s32.totalorder %s26, 0
      %p224 = por %p222, %p223
      %p225 = scmp.ne.s32.totalorder %s217, %s219
      %p226 = scmp.eq.s32.totalorder %s31, 1
      %p227 = por %p225, %p226
      %p228 = scmp.ne.s32.totalorder %s219, %s220
      %p229 = scmp.eq.s32.totalorder %s31, 0
      %p230 = por %p228, %p229
      %p231 = scmp.ne.s32.totalorder %s219, %s220
      %p232 = scmp.eq.s32.totalorder %s32, 1
      %p233 = por %p231, %p232
      %p235 = scmp.ne.s32.totalorder %s220, %s234
      %p236 = scmp.eq.s32.totalorder %s32, 0
      %p237 = por %p235, %p236
      %s239 = sadd.s32 %s238, 1
      %p242 = scmp.eq.s32.totalorder %s26, 1
      %p243 = scmp.ne.s32.totalorder %s238, %s240
      %p244 = scmp.eq.s32.totalorder %s26, 0
      %p245 = por %p243, %p244
      %p246 = scmp.ne.s32.totalorder %s238, %s240
      %p247 = scmp.eq.s32.totalorder %s31, 1
      %p248 = por %p246, %p247
      %p249 = scmp.ne.s32.totalorder %s240, %s241
      %p250 = scmp.eq.s32.totalorder %s31, 0
      %p251 = por %p249, %p250
      %p252 = scmp.ne.s32.totalorder %s240, %s241
      %p253 = scmp.eq.s32.totalorder %s32, 1
      %p254 = por %p252, %p253
      %p256 = scmp.ne.s32.totalorder %s241, %s255
      %p257 = scmp.eq.s32.totalorder %s32, 0
      %p258 = por %p256, %p257
      %s260 = sadd.s32 %s259, 1
      %p263 = scmp.eq.s32.totalorder %s26, 1
      %p264 = scmp.ne.s32.totalorder %s259, %s261
      %p265 = scmp.eq.s32.totalorder %s26, 0
      %p266 = por %p264, %p265
      %p267 = scmp.ne.s32.totalorder %s259, %s261
      %p268 = scmp.eq.s32.totalorder %s31, 1
      %p269 = por %p267, %p268
      %p270 = scmp.ne.s32.totalorder %s261, %s262
      %p271 = scmp.eq.s32.totalorder %s31, 0
      %p272 = por %p270, %p271
      %p273 = scmp.ne.s32.totalorder %s261, %s262
      %p274 = scmp.eq.s32.totalorder %s32, 1
      %p275 = por %p273, %p274
      %p277 = scmp.ne.s32.totalorder %s262, %s276
      %p278 = scmp.eq.s32.totalorder %s32, 0
      %p279 = por %p277, %p278
      %s280 = ssub.s32 %s33, %s45
      %s281 = ssub.s32 %s34, %s41
      %s282 = sor.u32 %s280, %s281
      %p283 = scmp.eq.s32.totalorder %s282, 0
      %s285 = sadd.s32 %s284, 1
      %s286 = scalar_select %p283, %s284, %s285
      %p289 = pneg %p283
      %p290 = scmp.eq.s32.totalorder %s26, 1
      %p291 = por %p289, %p290
      %p292 = scmp.ne.s32.totalorder %s284, %s287
      %p293 = scmp.eq.s32.totalorder %s26, 0
      %p294 = por %p292, %p293
      %p295 = scmp.ne.s32.totalorder %s284, %s287
      %p296 = scmp.eq.s32.totalorder %s31, 1
      %p297 = por %p295, %p296
      %p298 = scmp.ne.s32.totalorder %s287, %s288
      %p299 = scmp.eq.s32.totalorder %s31, 0
      %p300 = por %p298, %p299
      %p301 = scmp.ne.s32.totalorder %s287, %s288
      %p302 = scmp.eq.s32.totalorder %s32, 1
      %p303 = por %p301, %p302
      %p305 = scmp.ne.s32.totalorder %s288, %s304
      %p306 = scmp.eq.s32.totalorder %s32, 0
      %p307 = por %p305, %p306
      %p308 = scmp.le.s32.totalorder 1, %s26
      %p309 = scmp.lt.s32.totalorder %s26, 3
      %p310 = pnand %p308, %p309
      %p311 = pneg %p310
      // Predicated region
      $region9: #{tpu_custom_call.1} parent=5 // pred_check
        _
      $region10: #{tpu_custom_call.1} parent=5 // pred_check_branch
        %313 = sbr.rel (%p310) target = $region12
      $region11: #{tpu_custom_call.1} parent=5 // pred_region
        %s314 = ssub.s32 %s26, 1
        // Predicated region
        $region13: #{tpu_custom_call.1} parent=11 // pred_check
          %p315 = pneg %p167
        $region14: #{tpu_custom_call.1} parent=11 // pred_check_branch
          %317 = sbr.rel (%p315) target = $region16
        $region15: #{tpu_custom_call.1} parent=11 // pred_region
          _
        $region16: #{tpu_custom_call.1} parent=11 // pred_fallthru
          _
        // Predicated region
        $region17: #{tpu_custom_call.1} parent=11 // pred_check
          %p318 = pneg %p188
        $region18: #{tpu_custom_call.1} parent=11 // pred_check_branch
          %320 = sbr.rel (%p318) target = $region20
        $region19: #{tpu_custom_call.1} parent=11 // pred_region
          %s322 = ssub.s32 16, 16
          %323 = vsyncadd [#allocation11], %s322
          %s325 = sshll.u32 [#allocation10], 4
          %s326 = int_to_ptr.vmem [resolvable:$true] %s325
          %328 = dma.hbm_to_vmem [thread:$0]  %s5, 16, %s326, [#allocation11]
        $region20: #{tpu_custom_call.1} parent=11 // pred_fallthru
          _
        // Predicated region
        $region21: #{tpu_custom_call.1} parent=11 // pred_check
          %p329 = pneg %p209
        $region22: #{tpu_custom_call.1} parent=11 // pred_check_branch
          %331 = sbr.rel (%p329) target = $region24
        $region23: #{tpu_custom_call.1} parent=11 // pred_region
          _
        $region24: #{tpu_custom_call.1} parent=11 // pred_fallthru
          _
        // Predicated region
        $region25: #{tpu_custom_call.1} parent=11 // pred_check
          %p332 = pneg %p230
        $region26: #{tpu_custom_call.1} parent=11 // pred_check_branch
          %334 = sbr.rel (%p332) target = $region28
        $region27: #{tpu_custom_call.1} parent=11 // pred_region
          %s336 = ssub.s32 16, 16
          %337 = vsyncadd [#allocation11], %s336
          %s339 = sshll.u32 [#allocation12], 4
          %s340 = int_to_ptr.vmem [resolvable:$true] %s339
          %342 = dma.hbm_to_vmem [thread:$0]  %s7, 16, %s340, [#allocation11]
        $region28: #{tpu_custom_call.1} parent=11 // pred_fallthru
          _
        // Predicated region
        $region29: #{tpu_custom_call.1} parent=11 // pred_check
          %p343 = pneg %p251
        $region30: #{tpu_custom_call.1} parent=11 // pred_check_branch
          %345 = sbr.rel (%p343) target = $region32
        $region31: #{tpu_custom_call.1} parent=11 // pred_region
          _
        $region32: #{tpu_custom_call.1} parent=11 // pred_fallthru
          _
        // Predicated region
        $region33: #{tpu_custom_call.1} parent=11 // pred_check
          %p346 = pneg %p272
        $region34: #{tpu_custom_call.1} parent=11 // pred_check_branch
          %348 = sbr.rel (%p346) target = $region36
        $region35: #{tpu_custom_call.1} parent=11 // pred_region
          _
        $region36: #{tpu_custom_call.1} parent=11 // pred_fallthru
          _
      $region12: #{tpu_custom_call.1} parent=5 // pred_fallthru
        _
      %p349 = scmp.lt.s32.totalorder %s26, 2
      // Predicated region
      $region37: #{tpu_custom_call.1} parent=5 // pred_check
        %p350 = pneg %p349
      $region38: #{tpu_custom_call.1} parent=5 // pred_check_branch
        %352 = sbr.rel (%p350) target = $region40
      $region39: #{tpu_custom_call.1} parent=5 // pred_region
        // Predicated region
        $region41: #{tpu_custom_call.1} parent=39 // pred_check
          %p353 = pneg %p60
        $region42: #{tpu_custom_call.1} parent=39 // pred_check_branch
          %355 = sbr.rel (%p353) target = $region44
        $region43: #{tpu_custom_call.1} parent=39 // pred_region
          %s356 = sand.u32 %s50, 1
          %s357 = scalar_lea.sflag [#allocation5], %s356
          %s358 = sand.u32 %s50, 1
          %s359 = smul.addr %s358, 4
          %s360 = scalar_lea.vmem [#allocation4], %s359
          %s362 = ssub.s32 64, 64
          %363 = vsyncadd %s357, %s362
          %s364 = sadd.s32 %s34, %s33
          %s365 = smul.addr %s364, 64
          %s366 = scalar_lea.hbm %s0, %s365
          %s368 = sshll.u32 %s360, 4
          %s369 = int_to_ptr.vmem [resolvable:$true] %s368
          %371 = dma.hbm_to_vmem [thread:$0]  %s366, 64, %s369, %s357
        $region44: #{tpu_custom_call.1} parent=39 // pred_fallthru
          _
        // Predicated region
        $region45: #{tpu_custom_call.1} parent=39 // pred_check
          %p372 = pneg %p86
        $region46: #{tpu_custom_call.1} parent=39 // pred_check_branch
          %374 = sbr.rel (%p372) target = $region48
        $region47: #{tpu_custom_call.1} parent=39 // pred_region
          %s375 = sand.u32 %s26, 1
          %s376 = scalar_lea.sflag [#allocation8], %s375
          %s377 = sand.u32 %s76, 1
          %s378 = smul.addr %s377, 4
          %s379 = scalar_lea.vmem [#allocation7], %s378
          %s381 = ssub.s32 64, 64
          %382 = vsyncadd %s376, %s381
          %s383 = smul.addr %s33, 64
          %s384 = scalar_lea.hbm %s1, %s383
          %s386 = sshll.u32 %s379, 4
          %s387 = int_to_ptr.vmem [resolvable:$true] %s386
          %389 = dma.hbm_to_vmem [thread:$0]  %s384, 64, %s387, %s376
        $region48: #{tpu_custom_call.1} parent=39 // pred_fallthru
          _
        // Predicated region
        $region49: #{tpu_custom_call.1} parent=39 // pred_check
          %p390 = pneg %p112
        $region50: #{tpu_custom_call.1} parent=39 // pred_check_branch
          %392 = sbr.rel (%p390) target = $region52
        $region51: #{tpu_custom_call.1} parent=39 // pred_region
          %s393 = sand.u32 %s26, 1
          %s394 = scalar_lea.sflag [#allocation8], %s393
          %s395 = sand.u32 %s102, 1
          %s396 = smul.addr %s395, 4
          %s397 = scalar_lea.vmem [#allocation9], %s396
          %s399 = ssub.s32 64, 64
          %400 = vsyncadd %s394, %s399
          %s401 = smul.addr %s33, 64
          %s402 = scalar_lea.hbm %s2, %s401
          %s404 = sshll.u32 %s397, 4
          %s405 = int_to_ptr.vmem [resolvable:$true] %s404
          %407 = dma.hbm_to_vmem [thread:$0]  %s402, 64, %s405, %s394
        $region52: #{tpu_custom_call.1} parent=39 // pred_fallthru
          _
        // Predicated region
        $region53: #{tpu_custom_call.1} parent=39 // pred_check
          %p408 = pneg %p140
        $region54: #{tpu_custom_call.1} parent=39 // pred_check_branch
          %410 = sbr.rel (%p408) target = $region56
        $region55: #{tpu_custom_call.1} parent=39 // pred_region
          %p411 = scmp.lt.s32.totalorder %s33, 1
          %s412 = scalar_select %p411, %s33, 1
          %p413 = scmp.lt.s32.totalorder %s34, 0
          %s414 = scalar_select %p413, %s34, 0
          %s415 = sadd.s32 %s414, %s412
          %s416 = smul.addr %s415, 8
          %s417 = scalar_lea.vmem %s3, %s416
        $region56: #{tpu_custom_call.1} parent=39 // pred_fallthru
          _
      $region40: #{tpu_custom_call.1} parent=5 // pred_fallthru
        _
      %p418 = scmp.le.s32.totalorder 1, %s26
      %p419 = scmp.lt.s32.totalorder %s26, 3
      %p420 = pnand %p418, %p419
      %p421 = pneg %p420
      // Predicated region
      $region57: #{tpu_custom_call.1} parent=5 // pred_check
        _
      $region58: #{tpu_custom_call.1} parent=5 // pred_check_branch
        %423 = sbr.rel (%p420) target = $region60
      $region59: #{tpu_custom_call.1} parent=5 // pred_region
        %s424 = ssub.s32 %s26, 1
        %s425 = sand.u32 %s53, 1
        %s426 = scalar_lea.sflag [#allocation5], %s425
        %s427 = sand.u32 %s53, 1
        %s428 = smul.addr %s427, 4
        %s429 = scalar_lea.vmem [#allocation4], %s428
        // Predicated region
        $region61: #{tpu_custom_call.1} parent=59 // pred_check
          %p430 = pneg %p66
        $region62: #{tpu_custom_call.1} parent=59 // pred_check_branch
          %432 = sbr.rel (%p430) target = $region64
        $region63: #{tpu_custom_call.1} parent=59 // pred_region
          %433 = dma.done %s426, 64
        $region64: #{tpu_custom_call.1} parent=59 // pred_fallthru
          _
        %s434 = sand.u32 %s31, 1
        %s435 = scalar_lea.sflag [#allocation8], %s434
        %s436 = sand.u32 %s79, 1
        %s437 = smul.addr %s436, 4
        %s438 = scalar_lea.vmem [#allocation7], %s437
        // Predicated region
        $region65: #{tpu_custom_call.1} parent=59 // pred_check
          %p439 = pneg %p92
        $region66: #{tpu_custom_call.1} parent=59 // pred_check_branch
          %441 = sbr.rel (%p439) target = $region68
        $region67: #{tpu_custom_call.1} parent=59 // pred_region
          %442 = dma.done %s435, 64
        $region68: #{tpu_custom_call.1} parent=59 // pred_fallthru
          _
        %s443 = sand.u32 %s31, 1
        %s444 = scalar_lea.sflag [#allocation8], %s443
        %s445 = sand.u32 %s105, 1
        %s446 = smul.addr %s445, 4
        %s447 = scalar_lea.vmem [#allocation9], %s446
        // Predicated region
        $region69: #{tpu_custom_call.1} parent=59 // pred_check
          %p448 = pneg %p118
        $region70: #{tpu_custom_call.1} parent=59 // pred_check_branch
          %450 = sbr.rel (%p448) target = $region72
        $region71: #{tpu_custom_call.1} parent=59 // pred_region
          %451 = dma.done %s444, 64
        $region72: #{tpu_custom_call.1} parent=59 // pred_fallthru
          _
        // Predicated region
        $region73: #{tpu_custom_call.1} parent=59 // pred_check
          %p452 = pneg %p188
        $region74: #{tpu_custom_call.1} parent=59 // pred_check_branch
          %454 = sbr.rel (%p452) target = $region76
        $region75: #{tpu_custom_call.1} parent=59 // pred_region
          %455 = dma.done [#allocation11], 16
        $region76: #{tpu_custom_call.1} parent=59 // pred_fallthru
          _
        // Predicated region
        $region77: #{tpu_custom_call.1} parent=59 // pred_check
          %p456 = pneg %p230
        $region78: #{tpu_custom_call.1} parent=59 // pred_check_branch
          %458 = sbr.rel (%p456) target = $region80
        $region79: #{tpu_custom_call.1} parent=59 // pred_region
          %459 = dma.done [#allocation11], 16
        $region80: #{tpu_custom_call.1} parent=59 // pred_fallthru
          _
        %s460 = sand.u32 %s53, 1
        %s461 = scalar_lea.sflag [#allocation5], %s460
        %s462 = sand.u32 %s53, 1
        %s463 = smul.addr %s462, 4
        %s464 = scalar_lea.vmem [#allocation4], %s463
        %p465 = pneg %p66
        %p466 = pneg %p63
        %s467 = sand.u32 %s31, 1
        %s468 = scalar_lea.sflag [#allocation8], %s467
        %s469 = sand.u32 %s79, 1
        %s470 = smul.addr %s469, 4
        %s471 = scalar_lea.vmem [#allocation7], %s470
        %p472 = pneg %p92
        %p473 = pneg %p89
        %s474 = sand.u32 %s31, 1
        %s475 = scalar_lea.sflag [#allocation8], %s474
        %s476 = sand.u32 %s105, 1
        %s477 = smul.addr %s476, 4
        %s478 = scalar_lea.vmem [#allocation9], %s477
        %p479 = pneg %p118
        %p480 = pneg %p115
        %p481 = scmp.lt.s32.totalorder %s35, 1
        %s482 = scalar_select %p481, %s35, 1
        %p483 = scmp.lt.s32.totalorder %s36, 0
        %s484 = scalar_select %p483, %s36, 0
        %s485 = sadd.s32 %s484, %s482
        %s486 = smul.addr %s485, 8
        %s487 = scalar_lea.vmem %s3, %s486
        %p488 = pneg %p146
        %p489 = pneg %p143
        %p490 = pneg %p167
        %p491 = pneg %p164
        %p492 = pneg %p188
        %p493 = pneg %p185
        %p494 = pneg %p209
        %p495 = pneg %p206
        %p496 = pneg %p230
        %p497 = pneg %p227
        %p498 = pneg %p251
        %p499 = pneg %p248
        %p500 = pneg %p272
        %p501 = pneg %p269
        %p502 = pneg %p300
        %p503 = pneg %p297
        %s504 = sand.u32 %s287, 1
        %s505 = scalar_lea.sflag [#allocation6], %s504
        %s506 = sand.u32 %s287, 1
        %s507 = smul.addr %s506, 8
        %s508 = scalar_lea.vmem [#allocation13], %s507
        %p509 = scmp.lt.s32.totalorder %s35, 1
        %s510 = scalar_select %p509, %s35, 1
        %p511 = scmp.lt.s32.totalorder %s36, 0
        %s512 = scalar_select %p511, %s36, 0
        %s513 = sadd.s32 %s512, %s510
        %s514 = smul.addr %s513, 8
        %s515 = scalar_lea.vmem %s3, %s514
        %p517 = scmp.eq.s32.totalorder %s36, 0
        // Predicated region
        $region81: #{tpu_custom_call.1} parent=59 // pred_check
          %p518 = pneg %p517
        $region82: #{tpu_custom_call.1} parent=59 // pred_check_branch
          %520 = sbr.rel (%p518) target = $region84
        $region83: #{tpu_custom_call.1} parent=59 // pred_region
          %v521 = vld [vmem:[%s438] sm:$0xf]
          %v522 = vld [vmem:[%s447] sm:$0xf]
          %v523 = vld [vmem:[%s6] sm:$0xf]
          %v524 = vld [vmem:[%s6 + $0x4] sm:$0xf]
          %v525 = vld [vmem:[%s6 + $0x8] sm:$0xf]
          %v526 = vld [vmem:[%s6 + $0xc] sm:$0xf]
          %v527 = vld [vmem:[#allocation12] sm:$0x1]
          %v529 = vlaneseq
          %v530 = vshrl.u32 %v529, 7
          %v531 = vsub.s32 0, %v530
          %v532 = vrot.slane %v527, %v531
          %v538 = vunpack.c.l.b16 %v523
          %v539 = vunpack.c.l.b16 %v524
          %v540 = vunpack.c.l.b16 %v525
          %v541 = vunpack.c.l.b16 %v526
          %v542 = vpack.c.b16 %v539, %v538
          %v543 = vpack.c.b16 %v541, %v540
          %vm546 = vcmask 261120
          %v548 = vsel %vm546, %v521, 0
          %550 = vmatprep.subr.bf16.mxu0 0
          %551 = vmatpush1.bf16.msra.mxu0 %v542
          %552 = vmatprep.subr.bf16.mxu0 0
          %553 = vmatpush1.bf16.msra.mxu0 %v543
          %554 = vmatprep.subr.bf16.mxu0 0
          %555 = vmatpush1.bf16.msra.mxu0 0
          %556 = vmatprep.subr.bf16.mxu0 0
          %557 = vmatpush1.bf16.msra.mxu0 0
          %558 = vmatprep.subr.bf16.mxu0 0
          %559 = vmatpush1.bf16.msra.mxu0 0
          %560 = vmatprep.subr.bf16.mxu0 0
          %561 = vmatpush1.bf16.msra.mxu0 0
          %562 = vmatprep.subr.bf16.mxu0 0
          %563 = vmatpush1.bf16.msra.mxu0 0
          %564 = vmatprep.subr.bf16.mxu0 0
          %565 = vmatpush1.bf16.msra.mxu0 0
          %566 = vmatprep.subr.bf16.mxu0 0
          %567 = vmatpush1.bf16.msra.mxu0 0
          %568 = vmatprep.subr.bf16.mxu0 0
          %569 = vmatpush1.bf16.msra.mxu0 0
          %570 = vmatprep.subr.bf16.mxu0 0
          %571 = vmatpush1.bf16.msra.mxu0 0
          %572 = vmatprep.subr.bf16.mxu0 0
          %573 = vmatpush1.bf16.msra.mxu0 0
          %574 = vmatprep.subr.bf16.mxu0 0
          %575 = vmatpush1.bf16.msra.mxu0 0
          %576 = vmatprep.subr.bf16.mxu0 0
          %577 = vmatpush1.bf16.msra.mxu0 0
          %578 = vmatprep.subr.bf16.mxu0 0
          %579 = vmatpush1.bf16.msra.mxu0 0
          %580 = vmatprep.subr.bf16.mxu0 0
          %581 = vmatpush1.bf16.msra.mxu0 0
          %582 = vmatprep.mubr.bf16.mxu0 0
          %583 = vmatmul.mubr.bf16.gmra.mrb[0].mxu0 %v548
          %v584 = vpop.f32.mrb[0].mxu0
          %v585 = vadd.f32 %v532, %v584
          %v586 = vpop.f32.mrb[0].mxu0
          %v587 = vpop.f32.mrb[0].mxu0
          %v588 = vpop.f32.mrb[0].mxu0
          %589 = vdwg.mxu0
          %v590 = vld [vmem:[%s8] sm:$0xf]
          %v591 = vld [vmem:[%s8 + $0x4] sm:$0xf]
          %v592 = vld [vmem:[%s8 + $0x8] sm:$0xf]
          %v593 = vld [vmem:[%s8 + $0xc] sm:$0xf]
          %v594 = vld [vmem:[%s9] sm:$0x1]
          %v596 = vlaneseq
          %v597 = vshrl.u32 %v596, 7
          %v598 = vsub.s32 0, %v597
          %v599 = vrot.slane %v594, %v598
          %v605 = vunpack.c.l.b16 %v590
          %v606 = vunpack.c.l.b16 %v591
          %v607 = vunpack.c.l.b16 %v592
          %v608 = vunpack.c.l.b16 %v593
          %v609 = vpack.c.b16 %v606, %v605
          %v610 = vpack.c.b16 %v608, %v607
          %v614 = vsel %vm546, %v522, 0
          %616 = vmatprep.subr.bf16.mxu0 0
          %617 = vmatpush1.bf16.msra.mxu0 %v609
          %618 = vmatprep.subr.bf16.mxu0 0
          %619 = vmatpush1.bf16.msra.mxu0 %v610
          %620 = vmatprep.subr.bf16.mxu0 0
          %621 = vmatpush1.bf16.msra.mxu0 0
          %622 = vmatprep.subr.bf16.mxu0 0
          %623 = vmatpush1.bf16.msra.mxu0 0
          %624 = vmatprep.subr.bf16.mxu0 0
          %625 = vmatpush1.bf16.msra.mxu0 0
          %626 = vmatprep.subr.bf16.mxu0 0
          %627 = vmatpush1.bf16.msra.mxu0 0
          %628 = vmatprep.subr.bf16.mxu0 0
          %629 = vmatpush1.bf16.msra.mxu0 0
          %630 = vmatprep.subr.bf16.mxu0 0
          %631 = vmatpush1.bf16.msra.mxu0 0
          %632 = vmatprep.subr.bf16.mxu0 0
          %633 = vmatpush1.bf16.msra.mxu0 0
          %634 = vmatprep.subr.bf16.mxu0 0
          %635 = vmatpush1.bf16.msra.mxu0 0
          %636 = vmatprep.subr.bf16.mxu0 0
          %637 = vmatpush1.bf16.msra.mxu0 0
          %638 = vmatprep.subr.bf16.mxu0 0
          %639 = vmatpush1.bf16.msra.mxu0 0
          %640 = vmatprep.subr.bf16.mxu0 0
          %641 = vmatpush1.bf16.msra.mxu0 0
          %642 = vmatprep.subr.bf16.mxu0 0
          %643 = vmatpush1.bf16.msra.mxu0 0
          %644 = vmatprep.subr.bf16.mxu0 0
          %645 = vmatpush1.bf16.msra.mxu0 0
          %646 = vmatprep.subr.bf16.mxu0 0
          %647 = vmatpush1.bf16.msra.mxu0 0
          %648 = vmatprep.mubr.bf16.mxu0 0
          %649 = vmatmul.mubr.bf16.gmra.mrb[0].mxu0 %v614
          %v650 = vpop.f32.mrb[0].mxu0
          %v651 = vadd.f32 %v599, %v650
          %v652 = vpop.f32.mrb[0].mxu0
          %v653 = vpop.f32.mrb[0].mxu0
          %v654 = vpop.f32.mrb[0].mxu0
          %655 = vdwg.mxu0
          %v656 = vpack.c.bf16 %v585, %v585
          %vm657 = vcmask 257024
          %658 = vst.msk [vmem:[#allocation2] sm:$0xf] %vm657, %v656
          %v659 = vpack.c.bf16 %v651, %v651
          %660 = vst.msk [vmem:[#allocation3] sm:$0xf] %vm657, %v659
        $region84: #{tpu_custom_call.1} parent=59 // pred_fallthru
          _
        %v661 = vld [vmem:[%s429] sm:$0xf]
        %v662 = vld [vmem:[%s4] sm:$0xf]
        %v663 = vld [vmem:[%s4 + $0x4] sm:$0xf]
        %v664 = vld [vmem:[%s4 + $0x8] sm:$0xf]
        %v665 = vld [vmem:[%s4 + $0xc] sm:$0xf]
        %v666 = vld [vmem:[#allocation10] sm:$0x1]
        %v668 = vlaneseq
        %v669 = vshrl.u32 %v668, 7
        %v670 = vsub.s32 0, %v669
        %v671 = vrot.slane %v666, %v670
        %v677 = vunpack.c.l.b16 %v662
        %v678 = vunpack.c.l.b16 %v663
        %v679 = vunpack.c.l.b16 %v664
        %v680 = vunpack.c.l.b16 %v665
        %v681 = vpack.c.b16 %v678, %v677
        %v682 = vpack.c.b16 %v680, %v679
        %vm685 = vcmask 261120
        %v687 = vsel %vm685, %v661, 0
        %689 = vmatprep.subr.bf16.mxu0 0
        %690 = vmatpush1.bf16.msra.mxu0 %v681
        %691 = vmatprep.subr.bf16.mxu0 0
        %692 = vmatpush1.bf16.msra.mxu0 %v682
        %693 = vmatprep.subr.bf16.mxu0 0
        %694 = vmatpush1.bf16.msra.mxu0 0
        %695 = vmatprep.subr.bf16.mxu0 0
        %696 = vmatpush1.bf16.msra.mxu0 0
        %697 = vmatprep.subr.bf16.mxu0 0
        %698 = vmatpush1.bf16.msra.mxu0 0
        %699 = vmatprep.subr.bf16.mxu0 0
        %700 = vmatpush1.bf16.msra.mxu0 0
        %701 = vmatprep.subr.bf16.mxu0 0
        %702 = vmatpush1.bf16.msra.mxu0 0
        %703 = vmatprep.subr.bf16.mxu0 0
        %704 = vmatpush1.bf16.msra.mxu0 0
        %705 = vmatprep.subr.bf16.mxu0 0
        %706 = vmatpush1.bf16.msra.mxu0 0
        %707 = vmatprep.subr.bf16.mxu0 0
        %708 = vmatpush1.bf16.msra.mxu0 0
        %709 = vmatprep.subr.bf16.mxu0 0
        %710 = vmatpush1.bf16.msra.mxu0 0
        %711 = vmatprep.subr.bf16.mxu0 0
        %712 = vmatpush1.bf16.msra.mxu0 0
        %713 = vmatprep.subr.bf16.mxu0 0
        %714 = vmatpush1.bf16.msra.mxu0 0
        %715 = vmatprep.subr.bf16.mxu0 0
        %716 = vmatpush1.bf16.msra.mxu0 0
        %717 = vmatprep.subr.bf16.mxu0 0
        %718 = vmatpush1.bf16.msra.mxu0 0
        %719 = vmatprep.subr.bf16.mxu0 0
        %720 = vmatpush1.bf16.msra.mxu0 0
        %721 = vmatprep.mubr.bf16.mxu0 0
        %722 = vmatmul.mubr.bf16.gmra.mrb[0].mxu0 %v687
        %v723 = vpop.f32.mrb[0].mxu0
        %v724 = vadd.f32 %v671, %v723
        %v725 = vpop.f32.mrb[0].mxu0
        %v726 = vpop.f32.mrb[0].mxu0
        %v727 = vpop.f32.mrb[0].mxu0
        %728 = vdwg.mxu0
        %v729 = vpack.c.bf16 %v724, %v724
        %v730 = vld [vmem:[%s515] sm:$0xff]
        %v731 = vld [vmem:[#allocation2] sm:$0xf]
        %v732 = vld [vmem:[#allocation3] sm:$0xf]
        %vm733 = vcmask 64512
        %v735 = vsel %vm733, %v729, 0
        %v738 = vsel %vm733, %v731, 0
        %740 = vmatprep.subr.bf16.mxu0 0
        %741 = vmatpush1.bf16.xpose.msra.mxu0 %v738
        %742 = vmatprep.subr.bf16.mxu0 0
        %743 = vmatpush1.bf16.xpose.msra.mxu0 0
        %744 = vmatprep.subr.bf16.mxu0 0
        %745 = vmatpush1.bf16.xpose.msra.mxu0 0
        %746 = vmatprep.subr.bf16.mxu0 0
        %747 = vmatpush1.bf16.xpose.msra.mxu0 0
        %748 = vmatprep.subr.bf16.mxu0 0
        %749 = vmatpush1.bf16.xpose.msra.mxu0 0
        %750 = vmatprep.subr.bf16.mxu0 0
        %751 = vmatpush1.bf16.xpose.msra.mxu0 0
        %752 = vmatprep.subr.bf16.mxu0 0
        %753 = vmatpush1.bf16.xpose.msra.mxu0 0
        %754 = vmatprep.subr.bf16.mxu0 0
        %755 = vmatpush1.bf16.xpose.msra.mxu0 0
        %756 = vmatprep.subr.bf16.mxu0 0
        %757 = vmatpush1.bf16.xpose.msra.mxu0 0
        %758 = vmatprep.subr.bf16.mxu0 0
        %759 = vmatpush1.bf16.xpose.msra.mxu0 0
        %760 = vmatprep.subr.bf16.mxu0 0
        %761 = vmatpush1.bf16.xpose.msra.mxu0 0
        %762 = vmatprep.subr.bf16.mxu0 0
        %763 = vmatpush1.bf16.xpose.msra.mxu0 0
        %764 = vmatprep.subr.bf16.mxu0 0
        %765 = vmatpush1.bf16.xpose.msra.mxu0 0
        %766 = vmatprep.subr.bf16.mxu0 0
        %767 = vmatpush1.bf16.xpose.msra.mxu0 0
        %768 = vmatprep.subr.bf16.mxu0 0
        %769 = vmatpush1.bf16.xpose.msra.mxu0 0
        %770 = vmatprep.subr.bf16.mxu0 0
        %771 = vmatpush1.bf16.xpose.msra.mxu0 0
        %772 = vmatprep.mubr.bf16.mxu0 0
        %773 = vmatmul.mubr.bf16.gmra.mrb[0].mxu0 %v735
        %v774 = vpop.f32.mrb[0].mxu0
        %v775 = vadd.f32 0.0, %v774
        %v776 = vpop.f32.mrb[0].mxu0
        %v777 = vpop.f32.mrb[0].mxu0
        %v778 = vpop.f32.mrb[0].mxu0
        %779 = vdwg.mxu0
        %v780 = vsel %vm733, %v775, -inf
        %781 = vmax.xlane.f32.xlu0 %v780
        %v782 = vpop.xlane.xlu0 %781
        %v783 = vsub.f32 %v775, %v782
        %v784 = vmul.f32 %v783, 1.442695
        %v785 = vpow.pop %v784
        %v786 = vsel %vm733, %v785, 0.0
        %787 = vadd.xlane.f32.xlu0 %v786
        %v788 = vpop.xlane.xlu0 %787
        %v789 = vrcp.pop %v788
        %v790 = vpack.c.bf16 %v785, %v785
        %v792 = vsel %vm733, %v790, 0
        %vm794 = vcmask 1043456
        %v796 = vsel %vm794, %v732, 0
        %798 = vmatprep.subr.bf16.mxu0 0
        %799 = vmatpush1.bf16.msra.mxu0 %v796
        %800 = vmatprep.subr.bf16.mxu0 0
        %801 = vmatpush1.bf16.msra.mxu0 0
        %802 = vmatprep.subr.bf16.mxu0 0
        %803 = vmatpush1.bf16.msra.mxu0 0
        %804 = vmatprep.subr.bf16.mxu0 0
        %805 = vmatpush1.bf16.msra.mxu0 0
        %806 = vmatprep.subr.bf16.mxu0 0
        %807 = vmatpush1.bf16.msra.mxu0 0
        %808 = vmatprep.subr.bf16.mxu0 0
        %809 = vmatpush1.bf16.msra.mxu0 0
        %810 = vmatprep.subr.bf16.mxu0 0
        %811 = vmatpush1.bf16.msra.mxu0 0
        %812 = vmatprep.subr.bf16.mxu0 0
        %813 = vmatpush1.bf16.msra.mxu0 0
        %814 = vmatprep.subr.bf16.mxu0 0
        %815 = vmatpush1.bf16.msra.mxu0 0
        %816 = vmatprep.subr.bf16.mxu0 0
        %817 = vmatpush1.bf16.msra.mxu0 0
        %818 = vmatprep.subr.bf16.mxu0 0
        %819 = vmatpush1.bf16.msra.mxu0 0
        %820 = vmatprep.subr.bf16.mxu0 0
        %821 = vmatpush1.bf16.msra.mxu0 0
        %822 = vmatprep.subr.bf16.mxu0 0
        %823 = vmatpush1.bf16.msra.mxu0 0
        %824 = vmatprep.subr.bf16.mxu0 0
        %825 = vmatpush1.bf16.msra.mxu0 0
        %826 = vmatprep.subr.bf16.mxu0 0
        %827 = vmatpush1.bf16.msra.mxu0 0
        %828 = vmatprep.subr.bf16.mxu0 0
        %829 = vmatpush1.bf16.msra.mxu0 0
        %830 = vmatprep.mubr.bf16.mxu0 0
        %831 = vmatmul.mubr.bf16.gmra.mrb[0].mxu0 %v792
        %v832 = vpop.f32.mrb[0].mxu0
        %v833 = vadd.f32 0.0, %v832
        %v834 = vpop.f32.mrb[0].mxu0
        %v835 = vpop.f32.mrb[0].mxu0
        %v836 = vpop.f32.mrb[0].mxu0
        %837 = vdwg.mxu0
        %v838 = vmul.f32 %v789, %v730
        %840 = vset.pattern.permute.xlu0 0
        %841 = vperm.xlu0 %840, %v838
        %v842 = vpop.permute.xlu0 %841
        %v844 = vmul.f32 %v833, %v842
        %846 = vrot.lane.b32.xlu0 %v729, 120
        %v847 = vpop.permute.xlu0 %846
        %v849 = vunpack.c.l.b16 %v731
        %v850 = vpack.c.b16 %v849, %v849
        %851 = vrot.lane.b32.xlu0 %v850, 120
        %v852 = vpop.permute.xlu0 %851
        %v854 = vsel %vm733, %v847, 0
        %v857 = vsel %vm733, %v852, 0
        %859 = vmatprep.subr.bf16.mxu0 0
        %860 = vmatpush1.bf16.xpose.msra.mxu0 %v857
        %861 = vmatprep.subr.bf16.mxu0 0
        %862 = vmatpush1.bf16.xpose.msra.mxu0 0
        %863 = vmatprep.subr.bf16.mxu0 0
        %864 = vmatpush1.bf16.xpose.msra.mxu0 0
        %865 = vmatprep.subr.bf16.mxu0 0
        %866 = vmatpush1.bf16.xpose.msra.mxu0 0
        %867 = vmatprep.subr.bf16.mxu0 0
        %868 = vmatpush1.bf16.xpose.msra.mxu0 0
        %869 = vmatprep.subr.bf16.mxu0 0
        %870 = vmatpush1.bf16.xpose.msra.mxu0 0
        %871 = vmatprep.subr.bf16.mxu0 0
        %872 = vmatpush1.bf16.xpose.msra.mxu0 0
        %873 = vmatprep.subr.bf16.mxu0 0
        %874 = vmatpush1.bf16.xpose.msra.mxu0 0
        %875 = vmatprep.subr.bf16.mxu0 0
        %876 = vmatpush1.bf16.xpose.msra.mxu0 0
        %877 = vmatprep.subr.bf16.mxu0 0
        %878 = vmatpush1.bf16.xpose.msra.mxu0 0
        %879 = vmatprep.subr.bf16.mxu0 0
        %880 = vmatpush1.bf16.xpose.msra.mxu0 0
        %881 = vmatprep.subr.bf16.mxu0 0
        %882 = vmatpush1.bf16.xpose.msra.mxu0 0
        %883 = vmatprep.subr.bf16.mxu0 0
        %884 = vmatpush1.bf16.xpose.msra.mxu0 0
        %885 = vmatprep.subr.bf16.mxu0 0
        %886 = vmatpush1.bf16.xpose.msra.mxu0 0
        %887 = vmatprep.subr.bf16.mxu0 0
        %888 = vmatpush1.bf16.xpose.msra.mxu0 0
        %889 = vmatprep.subr.bf16.mxu0 0
        %890 = vmatpush1.bf16.xpose.msra.mxu0 0
        %891 = vmatprep.mubr.bf16.mxu0 0
        %892 = vmatmul.mubr.bf16.gmra.mrb[0].mxu0 %v854
        %v893 = vpop.f32.mrb[0].mxu0
        %v894 = vadd.f32 0.0, %v893
        %v895 = vpop.f32.mrb[0].mxu0
        %v896 = vpop.f32.mrb[0].mxu0
        %v897 = vpop.f32.mrb[0].mxu0
        %898 = vdwg.mxu0
        %v899 = vsel %vm733, %v894, -inf
        %900 = vmax.xlane.f32.xlu0 %v899
        %v901 = vpop.xlane.xlu0 %900
        %v902 = vsub.f32 %v894, %v901
        %v903 = vmul.f32 %v902, 1.442695
        %v904 = vpow.pop %v903
        %v905 = vsel %vm733, %v904, 0.0
        %906 = vadd.xlane.f32.xlu0 %v905
        %v907 = vpop.xlane.xlu0 %906
        %v908 = vrcp.pop %v907
        %v909 = vpack.c.bf16 %v904, %v904
        %v911 = vunpack.c.l.b16 %v732
        %v912 = vpack.c.b16 %v911, %v911
        %913 = vrot.lane.b32.xlu0 %v912, 120
        %v914 = vpop.permute.xlu0 %913
        %v916 = vsel %vm733, %v909, 0
        %v919 = vsel %vm794, %v914, 0
        %921 = vmatprep.subr.bf16.mxu0 0
        %922 = vmatpush1.bf16.msra.mxu0 %v919
        %923 = vmatprep.subr.bf16.mxu0 0
        %924 = vmatpush1.bf16.msra.mxu0 0
        %925 = vmatprep.subr.bf16.mxu0 0
        %926 = vmatpush1.bf16.msra.mxu0 0
        %927 = vmatprep.subr.bf16.mxu0 0
        %928 = vmatpush1.bf16.msra.mxu0 0
        %929 = vmatprep.subr.bf16.mxu0 0
        %930 = vmatpush1.bf16.msra.mxu0 0
        %931 = vmatprep.subr.bf16.mxu0 0
        %932 = vmatpush1.bf16.msra.mxu0 0
        %933 = vmatprep.subr.bf16.mxu0 0
        %934 = vmatpush1.bf16.msra.mxu0 0
        %935 = vmatprep.subr.bf16.mxu0 0
        %936 = vmatpush1.bf16.msra.mxu0 0
        %937 = vmatprep.subr.bf16.mxu0 0
        %938 = vmatpush1.bf16.msra.mxu0 0
        %939 = vmatprep.subr.bf16.mxu0 0
        %940 = vmatpush1.bf16.msra.mxu0 0
        %941 = vmatprep.subr.bf16.mxu0 0
        %942 = vmatpush1.bf16.msra.mxu0 0
        %943 = vmatprep.subr.bf16.mxu0 0
        %944 = vmatpush1.bf16.msra.mxu0 0
        %945 = vmatprep.subr.bf16.mxu0 0
        %946 = vmatpush1.bf16.msra.mxu0 0
        %947 = vmatprep.subr.bf16.mxu0 0
        %948 = vmatpush1.bf16.msra.mxu0 0
        %949 = vmatprep.subr.bf16.mxu0 0
        %950 = vmatpush1.bf16.msra.mxu0 0
        %951 = vmatprep.subr.bf16.mxu0 0
        %952 = vmatpush1.bf16.msra.mxu0 0
        %953 = vmatprep.mubr.bf16.mxu0 0
        %954 = vmatmul.mubr.bf16.gmra.mrb[0].mxu0 %v916
        %v955 = vpop.f32.mrb[0].mxu0
        %v956 = vadd.f32 0.0, %v955
        %v957 = vpop.f32.mrb[0].mxu0
        %v958 = vpop.f32.mrb[0].mxu0
        %v959 = vpop.f32.mrb[0].mxu0
        %960 = vdwg.mxu0
        %v961 = vmul.f32 %v908, %v730
        %963 = vset.pattern.permute.xlu0 0
        %964 = vperm.xlu0 %963, %v961
        %v965 = vpop.permute.xlu0 %964
        %v967 = vmul.f32 %v956, %v965
        %968 = vrot.lane.b32.xlu0 %v729, 112
        %v969 = vpop.permute.xlu0 %968
        %970 = vrot.lane.b32.xlu0 %v850, 112
        %v971 = vpop.permute.xlu0 %970
        %v973 = vsel %vm733, %v969, 0
        %v976 = vsel %vm733, %v971, 0
        %978 = vmatprep.subr.bf16.mxu0 0
        %979 = vmatpush1.bf16.xpose.msra.mxu0 %v976
        %980 = vmatprep.subr.bf16.mxu0 0
        %981 = vmatpush1.bf16.xpose.msra.mxu0 0
        %982 = vmatprep.subr.bf16.mxu0 0
        %983 = vmatpush1.bf16.xpose.msra.mxu0 0
        %984 = vmatprep.subr.bf16.mxu0 0
        %985 = vmatpush1.bf16.xpose.msra.mxu0 0
        %986 = vmatprep.subr.bf16.mxu0 0
        %987 = vmatpush1.bf16.xpose.msra.mxu0 0
        %988 = vmatprep.subr.bf16.mxu0 0
        %989 = vmatpush1.bf16.xpose.msra.mxu0 0
        %990 = vmatprep.subr.bf16.mxu0 0
        %991 = vmatpush1.bf16.xpose.msra.mxu0 0
        %992 = vmatprep.subr.bf16.mxu0 0
        %993 = vmatpush1.bf16.xpose.msra.mxu0 0
        %994 = vmatprep.subr.bf16.mxu0 0
        %995 = vmatpush1.bf16.xpose.msra.mxu0 0
        %996 = vmatprep.subr.bf16.mxu0 0
        %997 = vmatpush1.bf16.xpose.msra.mxu0 0
        %998 = vmatprep.subr.bf16.mxu0 0
        %999 = vmatpush1.bf16.xpose.msra.mxu0 0
        %1000 = vmatprep.subr.bf16.mxu0 0
        %1001 = vmatpush1.bf16.xpose.msra.mxu0 0
        %1002 = vmatprep.subr.bf16.mxu0 0
        %1003 = vmatpush1.bf16.xpose.msra.mxu0 0
        %1004 = vmatprep.subr.bf16.mxu0 0
        %1005 = vmatpush1.bf16.xpose.msra.mxu0 0
        %1006 = vmatprep.subr.bf16.mxu0 0
        %1007 = vmatpush1.bf16.xpose.msra.mxu0 0
        %1008 = vmatprep.subr.bf16.mxu0 0
        %1009 = vmatpush1.bf16.xpose.msra.mxu0 0
        %1010 = vmatprep.mubr.bf16.mxu0 0
        %1011 = vmatmul.mubr.bf16.gmra.mrb[0].mxu0 %v973
        %v1012 = vpop.f32.mrb[0].mxu0
        %v1013 = vadd.f32 0.0, %v1012
        %v1014 = vpop.f32.mrb[0].mxu0
        %v1015 = vpop.f32.mrb[0].mxu0
        %v1016 = vpop.f32.mrb[0].mxu0
        %1017 = vdwg.mxu0
        %v1018 = vsel %vm733, %v1013, -inf
        %1019 = vmax.xlane.f32.xlu0 %v1018
        %v1020 = vpop.xlane.xlu0 %1019
        %v1021 = vsub.f32 %v1013, %v1020
        %v1022 = vmul.f32 %v1021, 1.442695
        %v1023 = vpow.pop %v1022
        %v1024 = vsel %vm733, %v1023, 0.0
        %1025 = vadd.xlane.f32.xlu0 %v1024
        %v1026 = vpop.xlane.xlu0 %1025
        %v1027 = vrcp.pop %v1026
        %v1028 = vpack.c.bf16 %v1023, %v1023
        %1029 = vrot.lane.b32.xlu0 %v912, 112
        %v1030 = vpop.permute.xlu0 %1029
        %v1032 = vsel %vm733, %v1028, 0
        %v1035 = vsel %vm794, %v1030, 0
        %1037 = vmatprep.subr.bf16.mxu0 0
        %1038 = vmatpush1.bf16.msra.mxu0 %v1035
        %1039 = vmatprep.subr.bf16.mxu0 0
        %1040 = vmatpush1.bf16.msra.mxu0 0
        %1041 = vmatprep.subr.bf16.mxu0 0
        %1042 = vmatpush1.bf16.msra.mxu0 0
        %1043 = vmatprep.subr.bf16.mxu0 0
        %1044 = vmatpush1.bf16.msra.mxu0 0
        %1045 = vmatprep.subr.bf16.mxu0 0
        %1046 = vmatpush1.bf16.msra.mxu0 0
        %1047 = vmatprep.subr.bf16.mxu0 0
        %1048 = vmatpush1.bf16.msra.mxu0 0
        %1049 = vmatprep.subr.bf16.mxu0 0
        %1050 = vmatpush1.bf16.msra.mxu0 0
        %1051 = vmatprep.subr.bf16.mxu0 0
        %1052 = vmatpush1.bf16.msra.mxu0 0
        %1053 = vmatprep.subr.bf16.mxu0 0
        %1054 = vmatpush1.bf16.msra.mxu0 0
        %1055 = vmatprep.subr.bf16.mxu0 0
        %1056 = vmatpush1.bf16.msra.mxu0 0
        %1057 = vmatprep.subr.bf16.mxu0 0
        %1058 = vmatpush1.bf16.msra.mxu0 0
        %1059 = vmatprep.subr.bf16.mxu0 0
        %1060 = vmatpush1.bf16.msra.mxu0 0
        %1061 = vmatprep.subr.bf16.mxu0 0
        %1062 = vmatpush1.bf16.msra.mxu0 0
        %1063 = vmatprep.subr.bf16.mxu0 0
        %1064 = vmatpush1.bf16.msra.mxu0 0
        %1065 = vmatprep.subr.bf16.mxu0 0
        %1066 = vmatpush1.bf16.msra.mxu0 0
        %1067 = vmatprep.subr.bf16.mxu0 0
        %1068 = vmatpush1.bf16.msra.mxu0 0
        %1069 = vmatprep.mubr.bf16.mxu0 0
        %1070 = vmatmul.mubr.bf16.gmra.mrb[0].mxu0 %v1032
        %v1071 = vpop.f32.mrb[0].mxu0
        %v1072 = vadd.f32 0.0, %v1071
        %v1073 = vpop.f32.mrb[0].mxu0
        %v1074 = vpop.f32.mrb[0].mxu0
        %v1075 = vpop.f32.mrb[0].mxu0
        %1076 = vdwg.mxu0
        %v1077 = vmul.f32 %v1027, %v730
        %1079 = vset.pattern.permute.xlu0 0
        %1080 = vperm.xlu0 %1079, %v1077
        %v1081 = vpop.permute.xlu0 %1080
        %v1083 = vmul.f32 %v1072, %v1081
        %1084 = vrot.lane.b32.xlu0 %v729, 104
        %v1085 = vpop.permute.xlu0 %1084
        %1086 = vrot.lane.b32.xlu0 %v850, 104
        %v1087 = vpop.permute.xlu0 %1086
        %v1089 = vsel %vm733, %v1085, 0
        %v1092 = vsel %vm733, %v1087, 0
        %1094 = vmatprep.subr.bf16.mxu0 0
        %1095 = vmatpush1.bf16.xpose.msra.mxu0 %v1092
        %1096 = vmatprep.subr.bf16.mxu0 0
        %1097 = vmatpush1.bf16.xpose.msra.mxu0 0
        %1098 = vmatprep.subr.bf16.mxu0 0
        %1099 = vmatpush1.bf16.xpose.msra.mxu0 0
        %1100 = vmatprep.subr.bf16.mxu0 0
        %1101 = vmatpush1.bf16.xpose.msra.mxu0 0
        %1102 = vmatprep.subr.bf16.mxu0 0
        %1103 = vmatpush1.bf16.xpose.msra.mxu0 0
        %1104 = vmatprep.subr.bf16.mxu0 0
        %1105 = vmatpush1.bf16.xpose.msra.mxu0 0
        %1106 = vmatprep.subr.bf16.mxu0 0
        %1107 = vmatpush1.bf16.xpose.msra.mxu0 0
        %1108 = vmatprep.subr.bf16.mxu0 0
        %1109 = vmatpush1.bf16.xpose.msra.mxu0 0
        %1110 = vmatprep.subr.bf16.mxu0 0
        %1111 = vmatpush1.bf16.xpose.msra.mxu0 0
        %1112 = vmatprep.subr.bf16.mxu0 0
        %1113 = vmatpush1.bf16.xpose.msra.mxu0 0
        %1114 = vmatprep.subr.bf16.mxu0 0
        %1115 = vmatpush1.bf16.xpose.msra.mxu0 0
        %1116 = vmatprep.subr.bf16.mxu0 0
        %1117 = vmatpush1.bf16.xpose.msra.mxu0 0
        %1118 = vmatprep.subr.bf16.mxu0 0
        %1119 = vmatpush1.bf16.xpose.msra.mxu0 0
        %1120 = vmatprep.subr.bf16.mxu0 0
        %1121 = vmatpush1.bf16.xpose.msra.mxu0 0
        %1122 = vmatprep.subr.bf16.mxu0 0
        %1123 = vmatpush1.bf16.xpose.msra.mxu0 0
        %1124 = vmatprep.subr.bf16.mxu0 0
        %1125 = vmatpush1.bf16.xpose.msra.mxu0 0
        %1126 = vmatprep.mubr.bf16.mxu0 0
        %1127 = vmatmul.mubr.bf16.gmra.mrb[0].mxu0 %v1089
        %v1128 = vpop.f32.mrb[0].mxu0
        %v1129 = vadd.f32 0.0, %v1128
        %v1130 = vpop.f32.mrb[0].mxu0
        %v1131 = vpop.f32.mrb[0].mxu0
        %v1132 = vpop.f32.mrb[0].mxu0
        %1133 = vdwg.mxu0
        %v1134 = vsel %vm733, %v1129, -inf
        %1135 = vmax.xlane.f32.xlu0 %v1134
        %v1136 = vpop.xlane.xlu0 %1135
        %v1137 = vsub.f32 %v1129, %v1136
        %v1138 = vmul.f32 %v1137, 1.442695
        %v1139 = vpow.pop %v1138
        %v1140 = vsel %vm733, %v1139, 0.0
        %1141 = vadd.xlane.f32.xlu0 %v1140
        %v1142 = vpop.xlane.xlu0 %1141
        %v1143 = vrcp.pop %v1142
        %v1144 = vpack.c.bf16 %v1139, %v1139
        %1145 = vrot.lane.b32.xlu0 %v912, 104
        %v1146 = vpop.permute.xlu0 %1145
        %v1148 = vsel %vm733, %v1144, 0
        %v1151 = vsel %vm794, %v1146, 0
        %1153 = vmatprep.subr.bf16.mxu0 0
        %1154 = vmatpush1.bf16.msra.mxu0 %v1151
        %1155 = vmatprep.subr.bf16.mxu0 0
        %1156 = vmatpush1.bf16.msra.mxu0 0
        %1157 = vmatprep.subr.bf16.mxu0 0
        %1158 = vmatpush1.bf16.msra.mxu0 0
        %1159 = vmatprep.subr.bf16.mxu0 0
        %1160 = vmatpush1.bf16.msra.mxu0 0
        %1161 = vmatprep.subr.bf16.mxu0 0
        %1162 = vmatpush1.bf16.msra.mxu0 0
        %1163 = vmatprep.subr.bf16.mxu0 0
        %1164 = vmatpush1.bf16.msra.mxu0 0
        %1165 = vmatprep.subr.bf16.mxu0 0
        %1166 = vmatpush1.bf16.msra.mxu0 0
        %1167 = vmatprep.subr.bf16.mxu0 0
        %1168 = vmatpush1.bf16.msra.mxu0 0
        %1169 = vmatprep.subr.bf16.mxu0 0
        %1170 = vmatpush1.bf16.msra.mxu0 0
        %1171 = vmatprep.subr.bf16.mxu0 0
        %1172 = vmatpush1.bf16.msra.mxu0 0
        %1173 = vmatprep.subr.bf16.mxu0 0
        %1174 = vmatpush1.bf16.msra.mxu0 0
        %1175 = vmatprep.subr.bf16.mxu0 0
        %1176 = vmatpush1.bf16.msra.mxu0 0
        %1177 = vmatprep.subr.bf16.mxu0 0
        %1178 = vmatpush1.bf16.msra.mxu0 0
        %1179 = vmatprep.subr.bf16.mxu0 0
        %1180 = vmatpush1.bf16.msra.mxu0 0
        %1181 = vmatprep.subr.bf16.mxu0 0
        %1182 = vmatpush1.bf16.msra.mxu0 0
        %1183 = vmatprep.subr.bf16.mxu0 0
        %1184 = vmatpush1.bf16.msra.mxu0 0
        %1185 = vmatprep.mubr.bf16.mxu0 0
        %1186 = vmatmul.mubr.bf16.gmra.mrb[0].mxu0 %v1148
        %v1187 = vpop.f32.mrb[0].mxu0
        %v1188 = vadd.f32 0.0, %v1187
        %v1189 = vpop.f32.mrb[0].mxu0
        %v1190 = vpop.f32.mrb[0].mxu0
        %v1191 = vpop.f32.mrb[0].mxu0
        %1192 = vdwg.mxu0
        %v1193 = vmul.f32 %v1143, %v730
        %1195 = vset.pattern.permute.xlu0 0
        %1196 = vperm.xlu0 %1195, %v1193
        %v1197 = vpop.permute.xlu0 %1196
        %v1199 = vmul.f32 %v1188, %v1197
        %1201 = vrot.lane.b32.xlu0 %v967, 8
        %v1202 = vpop.permute.xlu0 %1201
        %1205 = vrot.lane.b32.xlu0 %v1083, 16
        %v1206 = vpop.permute.xlu0 %1205
        %1209 = vrot.lane.b32.xlu0 %v1199, 24
        %v1210 = vpop.permute.xlu0 %1209
        %v1212 = vsel %vm733, %v844, %v1202
        %vm1213 = vcmask 130048
        %v1214 = vsel %vm1213, %v1212, %v1206
        %vm1215 = vcmask 195584
        %v1216 = vsel %vm1215, %v1214, %v1210
        %1217 = vst.msk [vmem:[%s508] sm:$0xff] %vm685, %v1216
        %s1218 = sand.u32 %s287, 1
        %s1219 = scalar_lea.sflag [#allocation6], %s1218
        %s1220 = sand.u32 %s287, 1
        %s1221 = smul.addr %s1220, 8
        %s1222 = scalar_lea.vmem [#allocation13], %s1221
        // Predicated region
        $region85: #{tpu_custom_call.1} parent=59 // pred_check
          %p1223 = pneg %p297
        $region86: #{tpu_custom_call.1} parent=59 // pred_check_branch
          %1225 = sbr.rel (%p1223) target = $region88
        $region87: #{tpu_custom_call.1} parent=59 // pred_region
          %s1227 = ssub.s32 128, 128
          %1228 = vsyncadd %s1219, %s1227
          %s1229 = sadd.s32 %s36, %s35
          %s1230 = smul.addr %s1229, 128
          %s1231 = scalar_lea.hbm %s10, %s1230
          %s1233 = sshll.u32 %s1222, 4
          %s1234 = int_to_ptr.vmem [resolvable:$true] %s1233
          %1236 = dma.vmem_to_hbm [thread:$0]  %s1234, 128, %s1231, %s1219
        $region88: #{tpu_custom_call.1} parent=59 // pred_fallthru
          _
      $region60: #{tpu_custom_call.1} parent=5 // pred_fallthru
        _
      %p1237 = scmp.le.s32.totalorder 2, %s26
      // Predicated region
      $region89: #{tpu_custom_call.1} parent=5 // pred_check
        %p1238 = pneg %p1237
      $region90: #{tpu_custom_call.1} parent=5 // pred_check_branch
        %1240 = sbr.rel (%p1238) target = $region92
      $region91: #{tpu_custom_call.1} parent=5 // pred_region
        %s1241 = ssub.s32 %s26, 2
        // Predicated region
        $region93: #{tpu_custom_call.1} parent=91 // pred_check
          %p1242 = pneg %p303
        $region94: #{tpu_custom_call.1} parent=91 // pred_check_branch
          %1244 = sbr.rel (%p1242) target = $region96
        $region95: #{tpu_custom_call.1} parent=91 // pred_region
          %s1245 = sand.u32 %s288, 1
          %s1246 = scalar_lea.sflag [#allocation6], %s1245
          %s1247 = sand.u32 %s288, 1
          %s1248 = smul.addr %s1247, 8
          %s1249 = scalar_lea.vmem [#allocation13], %s1248
          %1250 = dma.done %s1246, 128
        $region96: #{tpu_custom_call.1} parent=91 // pred_fallthru
          _
      $region92: #{tpu_custom_call.1} parent=5 // pred_fallthru
        _
    $region6: #{tpu_custom_call.1} parent=1 // loop_footer
      %s30 = sadd.s32 1, %s26
    $region7: #{tpu_custom_call.1} parent=1 // loop_footer_branch
      %25 = sbr.rel target = $region3
    $region8: #{tpu_custom_call.1} parent=1 // loop_exit
      _
    %1251 = vsyncpa [#allocation5], 1
    %s1252 = scalar_lea.sflag [#allocation5], 1
    %1253 = vsyncpa %s1252, 1
    %1254 = vsyncpa [#allocation8], 1
    %s1255 = scalar_lea.sflag [#allocation8], 1
    %1256 = vsyncpa %s1255, 1
    %1257 = vsyncpa [#allocation11], 1
    %1258 = vsyncpa [#allocation6], 1
    %s1259 = scalar_lea.sflag [#allocation6], 1
    %1260 = vsyncpa %s1259, 1

</llo_original>
